<compile_context>
chip_gen: v6e
topology: v6e:2x2x1
jax: 0.10.0
libtpu: 0.0.40
codegen_flags: <defaults>
</compile_context>

<pallas_src>
import functools

import numpy as np
import jax
import jax.numpy as jnp
from jax import lax
from jax.experimental import pallas as pl
from jax.experimental.pallas import tpu as pltpu

SEQ_TO_TOKEN = {c: i for i, c in enumerate("ACGTNX-.")}  # synthetic vocab (len == 8)


def _mxu_dtype():
    """bf16 MXU operands on v6e/v7x (bf16 VPU/EUP present); f32 elsewhere (v5e)."""
    try:
        kind = jax.devices()[0].device_kind.lower()
    except Exception:
        return jnp.float32
    if ("v6" in kind) or ("v7" in kind) or ("tpu7" in kind):
        return jnp.bfloat16
    return jnp.float32


MXU_DTYPE = _mxu_dtype()


def _pick_t_chunk(t_pad, t_chunk):
    if t_chunk is not None:
        return t_chunk
    # One chunk for short sequences, else 512-step chunks: double-buffered
    # in/out blocks are ~2 MiB each (B=2 rows pad to 8 sublanes), comfortably
    # inside v5e's 16 MiB / v6e-v7x's 32 MiB scoped VMEM defaults.
    return t_pad if t_pad <= 512 else 512


def _pick_unroll(t_chunk):
    # Partial unroll that always divides the trip count (no remainder path).
    for u in (8, 4, 2):
        if t_chunk % u == 0:
            return u
    return 1


# ------------------------------- the layer kernel --------------------------------
def _lstm_chunk_kernel(*refs, t_chunk, hdim, unroll, emit_next):
    """One time chunk of a single LSTM layer.

    Input gx_ref holds gate pre-activations x @ W_ih + b for every step of the
    chunk, so only h @ W_hh remains on the serial dependency chain.  h/c are
    carried as fori_loop values (vregs); the persistent scratch is written once
    per chunk.  If `emit_next`, the per-step output is the NEXT layer's gate
    pre-activations (lane-dense 4H); otherwise it is h (final layer).
    """
    if emit_next:
        (len_ref, gx_ref, whh_ref, h0_ref, wnx_ref, bnx_ref,
         y_ref, h_scr, c_scr) = refs
    else:
        (len_ref, gx_ref, whh_ref, h0_ref, y_ref, h_scr, c_scr) = refs
        wnx_ref = bnx_ref = None

    tci = pl.program_id(0)

    @pl.when(tci == 0)                      # c0 == h0 (module calls lstm(x, (h, h)))
    def _():
        h_scr[...] = h0_ref[...]
        c_scr[...] = h0_ref[...]

    # Hoisted once per chunk (weights are pre-cast to the MXU dtype in the wrapper).
    whh = whh_ref[...]                      # (H, 4H)
    lens = len_ref[...]                     # (B, 1) int32
    step0 = tci * t_chunk                   # global index of the chunk's first step
    if emit_next:
        wnx = wnx_ref[...]                  # (H, 4H_next)
        bnx = bnx_ref[...]                  # (1, 4H_next) f32

    def step(t, carry):
        h, c = carry                        # f32, live in vregs for the whole chunk
        # Only h @ W_hh is on the serial chain; gx comes from the VMEM block.
        gates = gx_ref[t].astype(jnp.float32) + jnp.dot(
            h.astype(whh.dtype), whh, preferred_element_type=jnp.float32)
        # Two full-width (B, 4H) EUP pushes instead of four per-gate ones.
        s_all = jax.nn.sigmoid(gates)
        t_all = jnp.tanh(gates)
        i_g = s_all[:, 0 * hdim:1 * hdim]
        f_g = s_all[:, 1 * hdim:2 * hdim]
        o_g = s_all[:, 3 * hdim:4 * hdim]
        g_g = t_all[:, 2 * hdim:3 * hdim]
        c_new = f_g * c + i_g * g_g
        h_new = o_g * jnp.tanh(c_new)
        # pack_padded_sequence masking: freeze state / zero output past x_len.
        # Single VPU compare per step; it does not depend on h so it is off the
        # serial chain (precompute + dynamic-slice would just swap it for a load).
        valid = lens > (step0 + t)
        h_out = jnp.where(valid, h_new, h)
        c_out = jnp.where(valid, c_new, c)
        y_step = jnp.where(valid, h_new, 0.0)
        if emit_next:
            # Emit the NEXT layer's gate pre-activations: lane-dense (B, 4H_next)
            # store, and the projection never touches the next layer's hot path.
            # This matmul depends on h_new but nothing depends on it -> it
            # pipelines on the otherwise idle MXU.
            gxn = jnp.dot(y_step.astype(wnx.dtype), wnx,
                          preferred_element_type=jnp.float32) + bnx
            y_ref[t] = gxn.astype(y_ref.dtype)
        else:
            y_ref[t] = y_step.astype(y_ref.dtype)
        return h_out, c_out

    h_fin, c_fin = lax.fori_loop(0, t_chunk, step, (h_scr[...], c_scr[...]),
                                 unroll=unroll)
    h_scr[...] = h_fin                      # one scratch write-back per chunk
    c_scr[...] = c_fin


# ------------------------------- pallas_call wrapper ------------------------------
def lstm_layer(gx, x_len_2d, h0, w_hh, w_next=None, b_next=None, *, t_chunk=None):
    """Run one LSTM layer over the whole (time-major (T, B, 4H)) sequence.

    Returns the next layer's gx (T, B, 4H_next) if `w_next` is given, else the
    layer's hidden outputs (T, B, H) in f32.
    """
    t_pad, bsz, g4 = gx.shape
    hdim = h0.shape[1]
    t_chunk = _pick_t_chunk(t_pad, t_chunk)
    unroll = _pick_unroll(t_chunk)
    emit_next = w_next is not None

    kernel = functools.partial(_lstm_chunk_kernel, t_chunk=t_chunk, hdim=hdim,
                               unroll=unroll, emit_next=emit_next)

    in_specs = [
        pl.BlockSpec((bsz, 1), lambda t: (0, 0)),                 # lengths (resident)
        pl.BlockSpec((t_chunk, bsz, g4), lambda t: (t, 0, 0)),    # gx (time-chunked)
        pl.BlockSpec((hdim, 4 * hdim), lambda t: (0, 0)),         # W_hh (VMEM resident)
        pl.BlockSpec((bsz, hdim), lambda t: (0, 0)),              # h0 (== c0)
    ]
    args = [x_len_2d, gx, w_hh, h0]
    if emit_next:
        g4n = w_next.shape[1]
        in_specs += [pl.BlockSpec((hdim, g4n), lambda t: (0, 0)),  # W_ih (next layer)
                     pl.BlockSpec((1, g4n), lambda t: (0, 0))]     # bias (next layer)
        args += [w_next, b_next]
        out_shape = jax.ShapeDtypeStruct((t_pad, bsz, g4n), w_next.dtype)
        out_spec = pl.BlockSpec((t_chunk, bsz, g4n), lambda t: (t, 0, 0))
    else:
        out_shape = jax.ShapeDtypeStruct((t_pad, bsz, hdim), jnp.float32)
        out_spec = pl.BlockSpec((t_chunk, bsz, hdim), lambda t: (t, 0, 0))

    return pl.pallas_call(
        kernel,
        out_shape=out_shape,
        grid_spec=pltpu.PrefetchScalarGridSpec(
            num_scalar_prefetch=0,
            grid=(pl.cdiv(t_pad, t_chunk),),
            in_specs=in_specs,
            out_specs=out_spec,
            scratch_shapes=[pltpu.VMEM((bsz, hdim), jnp.float32),   # carried h
                            pltpu.VMEM((bsz, hdim), jnp.float32)],  # carried c
        ),
        compiler_params=pltpu.CompilerParams(
            dimension_semantics=("arbitrary",)),   # time axis carries h/c state
    )(*args)


# --------------------------------- module forward ---------------------------------
def sequence_embedding_forward(params, x_tokens, x_len_np, h, *, t_chunk=None):
    """x_tokens: (B, T_pad) int32 token ids (batch_first, like the module);
    x_len_np: host-side numpy lengths (B,) (PyTorch keeps these on CPU);
    h: (L, B, H) initial hidden state (the module uses (h, h) as (h0, c0))."""
    bsz, t_pad = x_tokens.shape
    hdim = h.shape[2]
    num_layers = len(params["lstm"])
    mxu = MXU_DTYPE

    x_len_np = np.asarray(x_len_np)
    # Partial-chunk masking correctness relies on every length being <= T_pad.
    assert int(x_len_np.max()) <= t_pad
    x_len_2d = jnp.asarray(x_len_np, jnp.int32).reshape(bsz, 1)

    # Embedding + layer-0 input projection + bias fused into a tiny table
    # F[v] = emb[v] @ W_ih0 + b0; layer 0's gx is a lane-dense (T, B, 4H) row
    # gather of F (the vocab has 8 rows), so tokens never enter a Pallas kernel.
    table = params["embedding"]
    w_ih0, _, b0 = params["lstm"][0]
    fused = (jnp.dot(table, w_ih0, preferred_element_type=jnp.float32)
             + b0).astype(mxu)
    tok_tm = jnp.transpose(x_tokens.astype(jnp.int32), (1, 0))     # (T_pad, B)
    gx = jnp.take(fused, tok_tm, axis=0)                           # (T_pad, B, 4H)

    y = None
    for layer in range(num_layers):
        w_hh = params["lstm"][layer][1].astype(mxu)
        if layer + 1 < num_layers:
            w_next, _, b_next = params["lstm"][layer + 1]
            gx = lstm_layer(gx, x_len_2d, h[layer], w_hh,
                            w_next.astype(mxu), b_next, t_chunk=t_chunk)
        else:
            y = lstm_layer(gx, x_len_2d, h[layer], w_hh, t_chunk=t_chunk)

    y = jnp.transpose(y, (1, 0, 2))                                # (B, T_pad, H)
    t_out = int(x_len_np.max())         # pad_packed truncation: host metadata only
    return y[:, :t_out, :], jnp.asarray(x_len_np, jnp.int32)


# --------------------------------- pure-JAX reference ------------------------------
def reference(params, x_tokens, x_len, h):
    emb = params["embedding"][x_tokens]                            # (B, T, D)
    bsz, t_pad, _ = emb.shape
    outs = emb
    for layer in range(len(params["lstm"])):
        w_ih, w_hh, b = params["lstm"][layer]
        hh, cc = h[layer], h[layer]
        hdim = hh.shape[1]
        ys = []
        for t in range(t_pad):
            gates = outs[:, t, :] @ w_ih + hh @ w_hh + b
            i_g = jax.nn.sigmoid(gates[:, :hdim])
            f_g = jax.nn.sigmoid(gates[:, hdim:2 * hdim])
            g_g = jnp.tanh(gates[:, 2 * hdim:3 * hdim])
            o_g = jax.nn.sigmoid(gates[:, 3 * hdim:])
            c_new = f_g * cc + i_g * g_g
            h_new = o_g * jnp.tanh(c_new)
            valid = (x_len > t)[:, None]
            hh = jnp.where(valid, h_new, hh)
            cc = jnp.where(valid, c_new, cc)
            ys.append(jnp.where(valid, h_new, 0.0))
        outs = jnp.stack(ys, axis=1)
    t_out = int(np.max(np.asarray(x_len)))
    return outs[:, :t_out, :]


if __name__ == "__main__":
    V = len(SEQ_TO_TOKEN)
    D, H, L = 16, 32, 2           # input_dim, hidden_dim, num_lstm_layers
    B, T_PAD = 2, 8

    key = jax.random.PRNGKey(0)
    k_emb, k_lstm, k_tok, k_h = jax.random.split(key, 4)

    embedding_table = 0.1 * jax.random.normal(k_emb, (V, D), jnp.float32)
    lstm_params = []
    kk = k_lstm
    scale = 1.0 / np.sqrt(H)
    for layer in range(L):
        din = D if layer == 0 else H
        kk, k1, k2, k3 = jax.random.split(kk, 4)
        # stored transposed vs PyTorch: (din, 4H) so kernels right-multiply
        w_ih = jax.random.uniform(k1, (din, 4 * H), jnp.float32, -scale, scale)
        w_hh = jax.random.uniform(k2, (H, 4 * H), jnp.float32, -scale, scale)
        b = jax.random.uniform(k3, (1, 4 * H), jnp.float32, -scale, scale)  # b_ih+b_hh
        lstm_params.append((w_ih, w_hh, b))
    params = {"embedding": embedding_table, "lstm": lstm_params}

    x_tokens = jax.random.randint(k_tok, (B, T_PAD), 0, V, jnp.int32)
    x_len_np = np.array([8, 5], dtype=np.int32)   # enforce_sorted=False: any order
    h0 = 0.1 * jax.random.normal(k_h, (L, B, H), jnp.float32)

    y, y_len = sequence_embedding_forward(params, x_tokens, x_len_np, h0)
    y = jax.block_until_ready(y)

    y_ref = reference(params, x_tokens, jnp.asarray(x_len_np), h0)
    assert y.shape == y_ref.shape == (B, int(x_len_np.max()), H)
    if MXU_DTYPE == jnp.bfloat16:
        rtol, atol = 5e-2, 3e-2   # bf16 MXU operands (h/c state & accumulation f32)
    else:
        rtol, atol = 1e-3, 1e-3
    np.testing.assert_allclose(np.asarray(y), np.asarray(y_ref), rtol=rtol, atol=atol)

    print("KERNEL_OK")
</pallas_src>

<mosaic_0001>
module attributes {stable_mosaic.version = 11 : i64} {
  func.func @_lstm_chunk_kernel(%arg0: i32, %arg1: memref<2x1xi32, #tpu.memory_space<vmem>>, %arg2: memref<8x2x128xf32, #tpu.memory_space<vmem>>, %arg3: memref<32x128xf32, #tpu.memory_space<vmem>>, %arg4: memref<2x32xf32, #tpu.memory_space<vmem>>, %arg5: memref<32x128xf32, #tpu.memory_space<vmem>>, %arg6: memref<1x128xf32, #tpu.memory_space<vmem>>, %arg7: memref<8x2x128xf32, #tpu.memory_space<vmem>>, %arg8: memref<2x32xf32, #tpu.memory_space<vmem>>, %arg9: memref<2x32xf32, #tpu.memory_space<vmem>>) attributes {dimension_semantics = [#tpu.dimension_semantics<arbitrary>], iteration_bounds = array<i64: 1>, scalar_prefetch = 0 : i64, scratch_operands = 2 : i64, tpu.core_type = #tpu.core_type<tc>, window_params = [{pipeline_mode = #tpu.pipeline_mode<synchronous>, transform_indices = @transform_0, window_bounds = array<i64: 2, 1>}, {transform_indices = @transform_1, window_bounds = array<i64: 8, 2, 128>}, {pipeline_mode = #tpu.pipeline_mode<synchronous>, transform_indices = @transform_2, window_bounds = array<i64: 32, 128>}, {pipeline_mode = #tpu.pipeline_mode<synchronous>, transform_indices = @transform_3, window_bounds = array<i64: 2, 32>}, {pipeline_mode = #tpu.pipeline_mode<synchronous>, transform_indices = @transform_4, window_bounds = array<i64: 32, 128>}, {pipeline_mode = #tpu.pipeline_mode<synchronous>, transform_indices = @transform_5, window_bounds = array<i64: 1, 128>}, {transform_indices = @transform_6, window_bounds = array<i64: 8, 2, 128>}]} {
    %c0_i32 = arith.constant 0 : i32
    %0 = arith.cmpi eq, %arg0, %c0_i32 : i32
    %1 = arith.extui %0 : i1 to i32
    %c0_i32_0 = arith.constant 0 : i32
    %2 = arith.cmpi ne, %1, %c0_i32_0 : i32
    scf.if %2 {
      %c0_81 = arith.constant 0 : index
      %c0_82 = arith.constant 0 : index
      %332 = vector.load %arg4[%c0_81, %c0_82] : memref<2x32xf32, #tpu.memory_space<vmem>>, vector<2x32xf32>
      %c0_83 = arith.constant 0 : index
      %c0_84 = arith.constant 0 : index
      %333 = vector.load %arg8[%c0_83, %c0_84] : memref<2x32xf32, #tpu.memory_space<vmem>>, vector<2x32xf32>
      tpu.vector_store %arg8[%c0_83, %c0_84], %332 {strides = array<i32>} : memref<2x32xf32, #tpu.memory_space<vmem>>, vector<2x32xf32>,
      %c0_85 = arith.constant 0 : index
      %c0_86 = arith.constant 0 : index
      %334 = vector.load %arg4[%c0_85, %c0_86] : memref<2x32xf32, #tpu.memory_space<vmem>>, vector<2x32xf32>
      %c0_87 = arith.constant 0 : index
      %c0_88 = arith.constant 0 : index
      %335 = vector.load %arg9[%c0_87, %c0_88] : memref<2x32xf32, #tpu.memory_space<vmem>>, vector<2x32xf32>
      tpu.vector_store %arg9[%c0_87, %c0_88], %334 {strides = array<i32>} : memref<2x32xf32, #tpu.memory_space<vmem>>, vector<2x32xf32>,
    } else {
    }
    %c0 = arith.constant 0 : index
    %c0_1 = arith.constant 0 : index
    %3 = vector.load %arg3[%c0, %c0_1] : memref<32x128xf32, #tpu.memory_space<vmem>>, vector<32x128xf32>
    %c0_2 = arith.constant 0 : index
    %c0_3 = arith.constant 0 : index
    %4 = vector.load %arg1[%c0_2, %c0_3] : memref<2x1xi32, #tpu.memory_space<vmem>>, vector<2x1xi32>
    %c8_i32 = arith.constant 8 : i32
    %5 = arith.muli %arg0, %c8_i32 : i32
    %c0_4 = arith.constant 0 : index
    %c0_5 = arith.constant 0 : index
    %6 = vector.load %arg5[%c0_4, %c0_5] : memref<32x128xf32, #tpu.memory_space<vmem>>, vector<32x128xf32>
    %c0_6 = arith.constant 0 : index
    %c0_7 = arith.constant 0 : index
    %7 = vector.load %arg6[%c0_6, %c0_7] : memref<1x128xf32, #tpu.memory_space<vmem>>, vector<1x128xf32>
    %c0_8 = arith.constant 0 : index
    %c0_9 = arith.constant 0 : index
    %8 = vector.load %arg8[%c0_8, %c0_9] : memref<2x32xf32, #tpu.memory_space<vmem>>, vector<2x32xf32>
    %c0_10 = arith.constant 0 : index
    %c0_11 = arith.constant 0 : index
    %9 = vector.load %arg9[%c0_10, %c0_11] : memref<2x32xf32, #tpu.memory_space<vmem>>, vector<2x32xf32>
    %c0_i32_12 = arith.constant 0 : i32
    %10 = arith.index_cast %c0_i32_12 : i32 to index
    %c0_13 = arith.constant 0 : index
    %c0_14 = arith.constant 0 : index
    %11 = vector.load %arg2[%10, %c0_13, %c0_14] : memref<8x2x128xf32, #tpu.memory_space<vmem>>, vector<1x2x128xf32>
    %12 = vector.shape_cast %11 : vector<1x2x128xf32> to vector<2x128xf32>
    %cst = arith.constant dense<0.000000e+00> : vector<2x128xf32>
    %13 = tpu.matmul %8, %3, %cst {dimension_numbers = #tpu.dot_dimension_numbers<[1], [0], [0], [1], [0, 0, 1, 1], [], []>} : vector<2x32xf32>, vector<32x128xf32>, vector<2x128xf32> -> vector<2x128xf32>
    %14 = arith.addf %12, %13 : vector<2x128xf32>
    %15 = arith.negf %14 : vector<2x128xf32>
    %16 = math.exp %15 : vector<2x128xf32>
    %cst_15 = arith.constant 1.000000e+00 : f32
    %17 = vector.broadcast %cst_15 : f32 to vector<2x128xf32>
    %18 = arith.addf %17, %16 : vector<2x128xf32>
    %19 = arith.divf %17, %18 : vector<2x128xf32>
    %20 = math.tanh %14 : vector<2x128xf32>
    %21 = vector.extract_strided_slice %19 {offsets = [0, 0], sizes = [2, 32], strides = [1, 1]} : vector<2x128xf32> to vector<2x32xf32>
    %22 = vector.extract_strided_slice %19 {offsets = [0, 32], sizes = [2, 32], strides = [1, 1]} : vector<2x128xf32> to vector<2x32xf32>
    %23 = vector.extract_strided_slice %19 {offsets = [0, 96], sizes = [2, 32], strides = [1, 1]} : vector<2x128xf32> to vector<2x32xf32>
    %24 = vector.extract_strided_slice %20 {offsets = [0, 64], sizes = [2, 32], strides = [1, 1]} : vector<2x128xf32> to vector<2x32xf32>
    %25 = arith.mulf %22, %9 : vector<2x32xf32>
    %26 = arith.mulf %21, %24 : vector<2x32xf32>
    %27 = arith.addf %25, %26 : vector<2x32xf32>
    %28 = math.tanh %27 : vector<2x32xf32>
    %29 = arith.mulf %23, %28 : vector<2x32xf32>
    %30 = arith.addi %5, %c0_i32_12 : i32
    %31 = vector.broadcast %30 : i32 to vector<2x1xi32>
    %32 = arith.cmpi sgt, %4, %31 : vector<2x1xi32>
    %33 = vector.shape_cast %32 : vector<2x1xi1> to vector<2x1xi1>
    %34 = vector.broadcast %33 : vector<2x1xi1> to vector<2x32xi1>
    %35 = arith.select %34, %29, %8 : vector<2x32xi1>, vector<2x32xf32>
    %36 = vector.shape_cast %32 : vector<2x1xi1> to vector<2x1xi1>
    %37 = vector.broadcast %36 : vector<2x1xi1> to vector<2x32xi1>
    %38 = arith.select %37, %27, %9 : vector<2x32xi1>, vector<2x32xf32>
    %cst_16 = arith.constant 0.000000e+00 : f32
    %39 = vector.shape_cast %32 : vector<2x1xi1> to vector<2x1xi1>
    %40 = vector.broadcast %39 : vector<2x1xi1> to vector<2x32xi1>
    %41 = vector.broadcast %cst_16 : f32 to vector<2x32xf32>
    %42 = arith.select %40, %29, %41 : vector<2x32xi1>, vector<2x32xf32>
    %cst_17 = arith.constant dense<0.000000e+00> : vector<2x128xf32>
    %43 = tpu.matmul %42, %6, %cst_17 {dimension_numbers = #tpu.dot_dimension_numbers<[1], [0], [0], [1], [0, 0, 1, 1], [], []>} : vector<2x32xf32>, vector<32x128xf32>, vector<2x128xf32> -> vector<2x128xf32>
    %44 = vector.broadcast %7 : vector<1x128xf32> to vector<2x128xf32>
    %45 = arith.addf %43, %44 : vector<2x128xf32>
    %46 = arith.index_cast %c0_i32_12 : i32 to index
    %c0_18 = arith.constant 0 : index
    %c0_19 = arith.constant 0 : index
    %47 = vector.load %arg7[%46, %c0_18, %c0_19] : memref<8x2x128xf32, #tpu.memory_space<vmem>>, vector<1x2x128xf32>
    %48 = vector.shape_cast %47 : vector<1x2x128xf32> to vector<2x128xf32>
    %49 = vector.shape_cast %45 : vector<2x128xf32> to vector<1x2x128xf32>
    tpu.vector_store %arg7[%46, %c0_18, %c0_19], %49 {strides = array<i32>} : memref<8x2x128xf32, #tpu.memory_space<vmem>>, vector<1x2x128xf32>,
    %c1_i32 = arith.constant 1 : i32
    %50 = arith.index_cast %c1_i32 : i32 to index
    %c0_20 = arith.constant 0 : index
    %c0_21 = arith.constant 0 : index
    %51 = vector.load %arg2[%50, %c0_20, %c0_21] : memref<8x2x128xf32, #tpu.memory_space<vmem>>, vector<1x2x128xf32>
    %52 = vector.shape_cast %51 : vector<1x2x128xf32> to vector<2x128xf32>
    %cst_22 = arith.constant dense<0.000000e+00> : vector<2x128xf32>
    %53 = tpu.matmul %35, %3, %cst_22 {dimension_numbers = #tpu.dot_dimension_numbers<[1], [0], [0], [1], [0, 0, 1, 1], [], []>} : vector<2x32xf32>, vector<32x128xf32>, vector<2x128xf32> -> vector<2x128xf32>
    %54 = arith.addf %52, %53 : vector<2x128xf32>
    %55 = arith.negf %54 : vector<2x128xf32>
    %56 = math.exp %55 : vector<2x128xf32>
    %cst_23 = arith.constant 1.000000e+00 : f32
    %57 = vector.broadcast %cst_23 : f32 to vector<2x128xf32>
    %58 = arith.addf %57, %56 : vector<2x128xf32>
    %59 = arith.divf %57, %58 : vector<2x128xf32>
    %60 = math.tanh %54 : vector<2x128xf32>
    %61 = vector.extract_strided_slice %59 {offsets = [0, 0], sizes = [2, 32], strides = [1, 1]} : vector<2x128xf32> to vector<2x32xf32>
    %62 = vector.extract_strided_slice %59 {offsets = [0, 32], sizes = [2, 32], strides = [1, 1]} : vector<2x128xf32> to vector<2x32xf32>
    %63 = vector.extract_strided_slice %59 {offsets = [0, 96], sizes = [2, 32], strides = [1, 1]} : vector<2x128xf32> to vector<2x32xf32>
    %64 = vector.extract_strided_slice %60 {offsets = [0, 64], sizes = [2, 32], strides = [1, 1]} : vector<2x128xf32> to vector<2x32xf32>
    %65 = arith.mulf %62, %38 : vector<2x32xf32>
    %66 = arith.mulf %61, %64 : vector<2x32xf32>
    %67 = arith.addf %65, %66 : vector<2x32xf32>
    %68 = math.tanh %67 : vector<2x32xf32>
    %69 = arith.mulf %63, %68 : vector<2x32xf32>
    %70 = arith.addi %5, %c1_i32 : i32
    %71 = vector.broadcast %70 : i32 to vector<2x1xi32>
    %72 = arith.cmpi sgt, %4, %71 : vector<2x1xi32>
    %73 = vector.shape_cast %72 : vector<2x1xi1> to vector<2x1xi1>
    %74 = vector.broadcast %73 : vector<2x1xi1> to vector<2x32xi1>
    %75 = arith.select %74, %69, %35 : vector<2x32xi1>, vector<2x32xf32>
    %76 = vector.shape_cast %72 : vector<2x1xi1> to vector<2x1xi1>
    %77 = vector.broadcast %76 : vector<2x1xi1> to vector<2x32xi1>
    %78 = arith.select %77, %67, %38 : vector<2x32xi1>, vector<2x32xf32>
    %cst_24 = arith.constant 0.000000e+00 : f32
    %79 = vector.shape_cast %72 : vector<2x1xi1> to vector<2x1xi1>
    %80 = vector.broadcast %79 : vector<2x1xi1> to vector<2x32xi1>
    %81 = vector.broadcast %cst_24 : f32 to vector<2x32xf32>
    %82 = arith.select %80, %69, %81 : vector<2x32xi1>, vector<2x32xf32>
    %cst_25 = arith.constant dense<0.000000e+00> : vector<2x128xf32>
    %83 = tpu.matmul %82, %6, %cst_25 {dimension_numbers = #tpu.dot_dimension_numbers<[1], [0], [0], [1], [0, 0, 1, 1], [], []>} : vector<2x32xf32>, vector<32x128xf32>, vector<2x128xf32> -> vector<2x128xf32>
    %84 = vector.broadcast %7 : vector<1x128xf32> to vector<2x128xf32>
    %85 = arith.addf %83, %84 : vector<2x128xf32>
    %86 = arith.index_cast %c1_i32 : i32 to index
    %c0_26 = arith.constant 0 : index
    %c0_27 = arith.constant 0 : index
    %87 = vector.load %arg7[%86, %c0_26, %c0_27] : memref<8x2x128xf32, #tpu.memory_space<vmem>>, vector<1x2x128xf32>
    %88 = vector.shape_cast %87 : vector<1x2x128xf32> to vector<2x128xf32>
    %89 = vector.shape_cast %85 : vector<2x128xf32> to vector<1x2x128xf32>
    tpu.vector_store %arg7[%86, %c0_26, %c0_27], %89 {strides = array<i32>} : memref<8x2x128xf32, #tpu.memory_space<vmem>>, vector<1x2x128xf32>,
    %c2_i32 = arith.constant 2 : i32
    %90 = arith.index_cast %c2_i32 : i32 to index
    %c0_28 = arith.constant 0 : index
    %c0_29 = arith.constant 0 : index
    %91 = vector.load %arg2[%90, %c0_28, %c0_29] : memref<8x2x128xf32, #tpu.memory_space<vmem>>, vector<1x2x128xf32>
    %92 = vector.shape_cast %91 : vector<1x2x128xf32> to vector<2x128xf32>
    %cst_30 = arith.constant dense<0.000000e+00> : vector<2x128xf32>
    %93 = tpu.matmul %75, %3, %cst_30 {dimension_numbers = #tpu.dot_dimension_numbers<[1], [0], [0], [1], [0, 0, 1, 1], [], []>} : vector<2x32xf32>, vector<32x128xf32>, vector<2x128xf32> -> vector<2x128xf32>
    %94 = arith.addf %92, %93 : vector<2x128xf32>
    %95 = arith.negf %94 : vector<2x128xf32>
    %96 = math.exp %95 : vector<2x128xf32>
    %cst_31 = arith.constant 1.000000e+00 : f32
    %97 = vector.broadcast %cst_31 : f32 to vector<2x128xf32>
    %98 = arith.addf %97, %96 : vector<2x128xf32>
    %99 = arith.divf %97, %98 : vector<2x128xf32>
    %100 = math.tanh %94 : vector<2x128xf32>
    %101 = vector.extract_strided_slice %99 {offsets = [0, 0], sizes = [2, 32], strides = [1, 1]} : vector<2x128xf32> to vector<2x32xf32>
    %102 = vector.extract_strided_slice %99 {offsets = [0, 32], sizes = [2, 32], strides = [1, 1]} : vector<2x128xf32> to vector<2x32xf32>
    %103 = vector.extract_strided_slice %99 {offsets = [0, 96], sizes = [2, 32], strides = [1, 1]} : vector<2x128xf32> to vector<2x32xf32>
    %104 = vector.extract_strided_slice %100 {offsets = [0, 64], sizes = [2, 32], strides = [1, 1]} : vector<2x128xf32> to vector<2x32xf32>
    %105 = arith.mulf %102, %78 : vector<2x32xf32>
    %106 = arith.mulf %101, %104 : vector<2x32xf32>
    %107 = arith.addf %105, %106 : vector<2x32xf32>
    %108 = math.tanh %107 : vector<2x32xf32>
    %109 = arith.mulf %103, %108 : vector<2x32xf32>
    %110 = arith.addi %5, %c2_i32 : i32
    %111 = vector.broadcast %110 : i32 to vector<2x1xi32>
    %112 = arith.cmpi sgt, %4, %111 : vector<2x1xi32>
    %113 = vector.shape_cast %112 : vector<2x1xi1> to vector<2x1xi1>
    %114 = vector.broadcast %113 : vector<2x1xi1> to vector<2x32xi1>
    %115 = arith.select %114, %109, %75 : vector<2x32xi1>, vector<2x32xf32>
    %116 = vector.shape_cast %112 : vector<2x1xi1> to vector<2x1xi1>
    %117 = vector.broadcast %116 : vector<2x1xi1> to vector<2x32xi1>
    %118 = arith.select %117, %107, %78 : vector<2x32xi1>, vector<2x32xf32>
    %cst_32 = arith.constant 0.000000e+00 : f32
    %119 = vector.shape_cast %112 : vector<2x1xi1> to vector<2x1xi1>
    %120 = vector.broadcast %119 : vector<2x1xi1> to vector<2x32xi1>
    %121 = vector.broadcast %cst_32 : f32 to vector<2x32xf32>
    %122 = arith.select %120, %109, %121 : vector<2x32xi1>, vector<2x32xf32>
    %cst_33 = arith.constant dense<0.000000e+00> : vector<2x128xf32>
    %123 = tpu.matmul %122, %6, %cst_33 {dimension_numbers = #tpu.dot_dimension_numbers<[1], [0], [0], [1], [0, 0, 1, 1], [], []>} : vector<2x32xf32>, vector<32x128xf32>, vector<2x128xf32> -> vector<2x128xf32>
    %124 = vector.broadcast %7 : vector<1x128xf32> to vector<2x128xf32>
    %125 = arith.addf %123, %124 : vector<2x128xf32>
    %126 = arith.index_cast %c2_i32 : i32 to index
    %c0_34 = arith.constant 0 : index
    %c0_35 = arith.constant 0 : index
    %127 = vector.load %arg7[%126, %c0_34, %c0_35] : memref<8x2x128xf32, #tpu.memory_space<vmem>>, vector<1x2x128xf32>
    %128 = vector.shape_cast %127 : vector<1x2x128xf32> to vector<2x128xf32>
    %129 = vector.shape_cast %125 : vector<2x128xf32> to vector<1x2x128xf32>
    tpu.vector_store %arg7[%126, %c0_34, %c0_35], %129 {strides = array<i32>} : memref<8x2x128xf32, #tpu.memory_space<vmem>>, vector<1x2x128xf32>,
    %c3_i32 = arith.constant 3 : i32
    %130 = arith.index_cast %c3_i32 : i32 to index
    %c0_36 = arith.constant 0 : index
    %c0_37 = arith.constant 0 : index
    %131 = vector.load %arg2[%130, %c0_36, %c0_37] : memref<8x2x128xf32, #tpu.memory_space<vmem>>, vector<1x2x128xf32>
    %132 = vector.shape_cast %131 : vector<1x2x128xf32> to vector<2x128xf32>
    %cst_38 = arith.constant dense<0.000000e+00> : vector<2x128xf32>
    %133 = tpu.matmul %115, %3, %cst_38 {dimension_numbers = #tpu.dot_dimension_numbers<[1], [0], [0], [1], [0, 0, 1, 1], [], []>} : vector<2x32xf32>, vector<32x128xf32>, vector<2x128xf32> -> vector<2x128xf32>
    %134 = arith.addf %132, %133 : vector<2x128xf32>
    %135 = arith.negf %134 : vector<2x128xf32>
    %136 = math.exp %135 : vector<2x128xf32>
    %cst_39 = arith.constant 1.000000e+00 : f32
    %137 = vector.broadcast %cst_39 : f32 to vector<2x128xf32>
    %138 = arith.addf %137, %136 : vector<2x128xf32>
    %139 = arith.divf %137, %138 : vector<2x128xf32>
    %140 = math.tanh %134 : vector<2x128xf32>
    %141 = vector.extract_strided_slice %139 {offsets = [0, 0], sizes = [2, 32], strides = [1, 1]} : vector<2x128xf32> to vector<2x32xf32>
    %142 = vector.extract_strided_slice %139 {offsets = [0, 32], sizes = [2, 32], strides = [1, 1]} : vector<2x128xf32> to vector<2x32xf32>
    %143 = vector.extract_strided_slice %139 {offsets = [0, 96], sizes = [2, 32], strides = [1, 1]} : vector<2x128xf32> to vector<2x32xf32>
    %144 = vector.extract_strided_slice %140 {offsets = [0, 64], sizes = [2, 32], strides = [1, 1]} : vector<2x128xf32> to vector<2x32xf32>
    %145 = arith.mulf %142, %118 : vector<2x32xf32>
    %146 = arith.mulf %141, %144 : vector<2x32xf32>
    %147 = arith.addf %145, %146 : vector<2x32xf32>
    %148 = math.tanh %147 : vector<2x32xf32>
    %149 = arith.mulf %143, %148 : vector<2x32xf32>
    %150 = arith.addi %5, %c3_i32 : i32
    %151 = vector.broadcast %150 : i32 to vector<2x1xi32>
    %152 = arith.cmpi sgt, %4, %151 : vector<2x1xi32>
    %153 = vector.shape_cast %152 : vector<2x1xi1> to vector<2x1xi1>
    %154 = vector.broadcast %153 : vector<2x1xi1> to vector<2x32xi1>
    %155 = arith.select %154, %149, %115 : vector<2x32xi1>, vector<2x32xf32>
    %156 = vector.shape_cast %152 : vector<2x1xi1> to vector<2x1xi1>
    %157 = vector.broadcast %156 : vector<2x1xi1> to vector<2x32xi1>
    %158 = arith.select %157, %147, %118 : vector<2x32xi1>, vector<2x32xf32>
    %cst_40 = arith.constant 0.000000e+00 : f32
    %159 = vector.shape_cast %152 : vector<2x1xi1> to vector<2x1xi1>
    %160 = vector.broadcast %159 : vector<2x1xi1> to vector<2x32xi1>
    %161 = vector.broadcast %cst_40 : f32 to vector<2x32xf32>
    %162 = arith.select %160, %149, %161 : vector<2x32xi1>, vector<2x32xf32>
    %cst_41 = arith.constant dense<0.000000e+00> : vector<2x128xf32>
    %163 = tpu.matmul %162, %6, %cst_41 {dimension_numbers = #tpu.dot_dimension_numbers<[1], [0], [0], [1], [0, 0, 1, 1], [], []>} : vector<2x32xf32>, vector<32x128xf32>, vector<2x128xf32> -> vector<2x128xf32>
    %164 = vector.broadcast %7 : vector<1x128xf32> to vector<2x128xf32>
    %165 = arith.addf %163, %164 : vector<2x128xf32>
    %166 = arith.index_cast %c3_i32 : i32 to index
    %c0_42 = arith.constant 0 : index
    %c0_43 = arith.constant 0 : index
    %167 = vector.load %arg7[%166, %c0_42, %c0_43] : memref<8x2x128xf32, #tpu.memory_space<vmem>>, vector<1x2x128xf32>
    %168 = vector.shape_cast %167 : vector<1x2x128xf32> to vector<2x128xf32>
    %169 = vector.shape_cast %165 : vector<2x128xf32> to vector<1x2x128xf32>
    tpu.vector_store %arg7[%166, %c0_42, %c0_43], %169 {strides = array<i32>} : memref<8x2x128xf32, #tpu.memory_space<vmem>>, vector<1x2x128xf32>,
    %c4_i32 = arith.constant 4 : i32
    %170 = arith.index_cast %c4_i32 : i32 to index
    %c0_44 = arith.constant 0 : index
    %c0_45 = arith.constant 0 : index
    %171 = vector.load %arg2[%170, %c0_44, %c0_45] : memref<8x2x128xf32, #tpu.memory_space<vmem>>, vector<1x2x128xf32>
    %172 = vector.shape_cast %171 : vector<1x2x128xf32> to vector<2x128xf32>
    %cst_46 = arith.constant dense<0.000000e+00> : vector<2x128xf32>
    %173 = tpu.matmul %155, %3, %cst_46 {dimension_numbers = #tpu.dot_dimension_numbers<[1], [0], [0], [1], [0, 0, 1, 1], [], []>} : vector<2x32xf32>, vector<32x128xf32>, vector<2x128xf32> -> vector<2x128xf32>
    %174 = arith.addf %172, %173 : vector<2x128xf32>
    %175 = arith.negf %174 : vector<2x128xf32>
    %176 = math.exp %175 : vector<2x128xf32>
    %cst_47 = arith.constant 1.000000e+00 : f32
    %177 = vector.broadcast %cst_47 : f32 to vector<2x128xf32>
    %178 = arith.addf %177, %176 : vector<2x128xf32>
    %179 = arith.divf %177, %178 : vector<2x128xf32>
    %180 = math.tanh %174 : vector<2x128xf32>
    %181 = vector.extract_strided_slice %179 {offsets = [0, 0], sizes = [2, 32], strides = [1, 1]} : vector<2x128xf32> to vector<2x32xf32>
    %182 = vector.extract_strided_slice %179 {offsets = [0, 32], sizes = [2, 32], strides = [1, 1]} : vector<2x128xf32> to vector<2x32xf32>
    %183 = vector.extract_strided_slice %179 {offsets = [0, 96], sizes = [2, 32], strides = [1, 1]} : vector<2x128xf32> to vector<2x32xf32>
    %184 = vector.extract_strided_slice %180 {offsets = [0, 64], sizes = [2, 32], strides = [1, 1]} : vector<2x128xf32> to vector<2x32xf32>
    %185 = arith.mulf %182, %158 : vector<2x32xf32>
    %186 = arith.mulf %181, %184 : vector<2x32xf32>
    %187 = arith.addf %185, %186 : vector<2x32xf32>
    %188 = math.tanh %187 : vector<2x32xf32>
    %189 = arith.mulf %183, %188 : vector<2x32xf32>
    %190 = arith.addi %5, %c4_i32 : i32
    %191 = vector.broadcast %190 : i32 to vector<2x1xi32>
    %192 = arith.cmpi sgt, %4, %191 : vector<2x1xi32>
    %193 = vector.shape_cast %192 : vector<2x1xi1> to vector<2x1xi1>
    %194 = vector.broadcast %193 : vector<2x1xi1> to vector<2x32xi1>
    %195 = arith.select %194, %189, %155 : vector<2x32xi1>, vector<2x32xf32>
    %196 = vector.shape_cast %192 : vector<2x1xi1> to vector<2x1xi1>
    %197 = vector.broadcast %196 : vector<2x1xi1> to vector<2x32xi1>
    %198 = arith.select %197, %187, %158 : vector<2x32xi1>, vector<2x32xf32>
    %cst_48 = arith.constant 0.000000e+00 : f32
    %199 = vector.shape_cast %192 : vector<2x1xi1> to vector<2x1xi1>
    %200 = vector.broadcast %199 : vector<2x1xi1> to vector<2x32xi1>
    %201 = vector.broadcast %cst_48 : f32 to vector<2x32xf32>
    %202 = arith.select %200, %189, %201 : vector<2x32xi1>, vector<2x32xf32>
    %cst_49 = arith.constant dense<0.000000e+00> : vector<2x128xf32>
    %203 = tpu.matmul %202, %6, %cst_49 {dimension_numbers = #tpu.dot_dimension_numbers<[1], [0], [0], [1], [0, 0, 1, 1], [], []>} : vector<2x32xf32>, vector<32x128xf32>, vector<2x128xf32> -> vector<2x128xf32>
    %204 = vector.broadcast %7 : vector<1x128xf32> to vector<2x128xf32>
    %205 = arith.addf %203, %204 : vector<2x128xf32>
    %206 = arith.index_cast %c4_i32 : i32 to index
    %c0_50 = arith.constant 0 : index
    %c0_51 = arith.constant 0 : index
    %207 = vector.load %arg7[%206, %c0_50, %c0_51] : memref<8x2x128xf32, #tpu.memory_space<vmem>>, vector<1x2x128xf32>
    %208 = vector.shape_cast %207 : vector<1x2x128xf32> to vector<2x128xf32>
    %209 = vector.shape_cast %205 : vector<2x128xf32> to vector<1x2x128xf32>
    tpu.vector_store %arg7[%206, %c0_50, %c0_51], %209 {strides = array<i32>} : memref<8x2x128xf32, #tpu.memory_space<vmem>>, vector<1x2x128xf32>,
    %c5_i32 = arith.constant 5 : i32
    %210 = arith.index_cast %c5_i32 : i32 to index
    %c0_52 = arith.constant 0 : index
    %c0_53 = arith.constant 0 : index
    %211 = vector.load %arg2[%210, %c0_52, %c0_53] : memref<8x2x128xf32, #tpu.memory_space<vmem>>, vector<1x2x128xf32>
    %212 = vector.shape_cast %211 : vector<1x2x128xf32> to vector<2x128xf32>
    %cst_54 = arith.constant dense<0.000000e+00> : vector<2x128xf32>
    %213 = tpu.matmul %195, %3, %cst_54 {dimension_numbers = #tpu.dot_dimension_numbers<[1], [0], [0], [1], [0, 0, 1, 1], [], []>} : vector<2x32xf32>, vector<32x128xf32>, vector<2x128xf32> -> vector<2x128xf32>
    %214 = arith.addf %212, %213 : vector<2x128xf32>
    %215 = arith.negf %214 : vector<2x128xf32>
    %216 = math.exp %215 : vector<2x128xf32>
    %cst_55 = arith.constant 1.000000e+00 : f32
    %217 = vector.broadcast %cst_55 : f32 to vector<2x128xf32>
    %218 = arith.addf %217, %216 : vector<2x128xf32>
    %219 = arith.divf %217, %218 : vector<2x128xf32>
    %220 = math.tanh %214 : vector<2x128xf32>
    %221 = vector.extract_strided_slice %219 {offsets = [0, 0], sizes = [2, 32], strides = [1, 1]} : vector<2x128xf32> to vector<2x32xf32>
    %222 = vector.extract_strided_slice %219 {offsets = [0, 32], sizes = [2, 32], strides = [1, 1]} : vector<2x128xf32> to vector<2x32xf32>
    %223 = vector.extract_strided_slice %219 {offsets = [0, 96], sizes = [2, 32], strides = [1, 1]} : vector<2x128xf32> to vector<2x32xf32>
    %224 = vector.extract_strided_slice %220 {offsets = [0, 64], sizes = [2, 32], strides = [1, 1]} : vector<2x128xf32> to vector<2x32xf32>
    %225 = arith.mulf %222, %198 : vector<2x32xf32>
    %226 = arith.mulf %221, %224 : vector<2x32xf32>
    %227 = arith.addf %225, %226 : vector<2x32xf32>
    %228 = math.tanh %227 : vector<2x32xf32>
    %229 = arith.mulf %223, %228 : vector<2x32xf32>
    %230 = arith.addi %5, %c5_i32 : i32
    %231 = vector.broadcast %230 : i32 to vector<2x1xi32>
    %232 = arith.cmpi sgt, %4, %231 : vector<2x1xi32>
    %233 = vector.shape_cast %232 : vector<2x1xi1> to vector<2x1xi1>
    %234 = vector.broadcast %233 : vector<2x1xi1> to vector<2x32xi1>
    %235 = arith.select %234, %229, %195 : vector<2x32xi1>, vector<2x32xf32>
    %236 = vector.shape_cast %232 : vector<2x1xi1> to vector<2x1xi1>
    %237 = vector.broadcast %236 : vector<2x1xi1> to vector<2x32xi1>
    %238 = arith.select %237, %227, %198 : vector<2x32xi1>, vector<2x32xf32>
    %cst_56 = arith.constant 0.000000e+00 : f32
    %239 = vector.shape_cast %232 : vector<2x1xi1> to vector<2x1xi1>
    %240 = vector.broadcast %239 : vector<2x1xi1> to vector<2x32xi1>
    %241 = vector.broadcast %cst_56 : f32 to vector<2x32xf32>
    %242 = arith.select %240, %229, %241 : vector<2x32xi1>, vector<2x32xf32>
    %cst_57 = arith.constant dense<0.000000e+00> : vector<2x128xf32>
    %243 = tpu.matmul %242, %6, %cst_57 {dimension_numbers = #tpu.dot_dimension_numbers<[1], [0], [0], [1], [0, 0, 1, 1], [], []>} : vector<2x32xf32>, vector<32x128xf32>, vector<2x128xf32> -> vector<2x128xf32>
    %244 = vector.broadcast %7 : vector<1x128xf32> to vector<2x128xf32>
    %245 = arith.addf %243, %244 : vector<2x128xf32>
    %246 = arith.index_cast %c5_i32 : i32 to index
    %c0_58 = arith.constant 0 : index
    %c0_59 = arith.constant 0 : index
    %247 = vector.load %arg7[%246, %c0_58, %c0_59] : memref<8x2x128xf32, #tpu.memory_space<vmem>>, vector<1x2x128xf32>
    %248 = vector.shape_cast %247 : vector<1x2x128xf32> to vector<2x128xf32>
    %249 = vector.shape_cast %245 : vector<2x128xf32> to vector<1x2x128xf32>
    tpu.vector_store %arg7[%246, %c0_58, %c0_59], %249 {strides = array<i32>} : memref<8x2x128xf32, #tpu.memory_space<vmem>>, vector<1x2x128xf32>,
    %c6_i32 = arith.constant 6 : i32
    %250 = arith.index_cast %c6_i32 : i32 to index
    %c0_60 = arith.constant 0 : index
    %c0_61 = arith.constant 0 : index
    %251 = vector.load %arg2[%250, %c0_60, %c0_61] : memref<8x2x128xf32, #tpu.memory_space<vmem>>, vector<1x2x128xf32>
    %252 = vector.shape_cast %251 : vector<1x2x128xf32> to vector<2x128xf32>
    %cst_62 = arith.constant dense<0.000000e+00> : vector<2x128xf32>
    %253 = tpu.matmul %235, %3, %cst_62 {dimension_numbers = #tpu.dot_dimension_numbers<[1], [0], [0], [1], [0, 0, 1, 1], [], []>} : vector<2x32xf32>, vector<32x128xf32>, vector<2x128xf32> -> vector<2x128xf32>
    %254 = arith.addf %252, %253 : vector<2x128xf32>
    %255 = arith.negf %254 : vector<2x128xf32>
    %256 = math.exp %255 : vector<2x128xf32>
    %cst_63 = arith.constant 1.000000e+00 : f32
    %257 = vector.broadcast %cst_63 : f32 to vector<2x128xf32>
    %258 = arith.addf %257, %256 : vector<2x128xf32>
    %259 = arith.divf %257, %258 : vector<2x128xf32>
    %260 = math.tanh %254 : vector<2x128xf32>
    %261 = vector.extract_strided_slice %259 {offsets = [0, 0], sizes = [2, 32], strides = [1, 1]} : vector<2x128xf32> to vector<2x32xf32>
    %262 = vector.extract_strided_slice %259 {offsets = [0, 32], sizes = [2, 32], strides = [1, 1]} : vector<2x128xf32> to vector<2x32xf32>
    %263 = vector.extract_strided_slice %259 {offsets = [0, 96], sizes = [2, 32], strides = [1, 1]} : vector<2x128xf32> to vector<2x32xf32>
    %264 = vector.extract_strided_slice %260 {offsets = [0, 64], sizes = [2, 32], strides = [1, 1]} : vector<2x128xf32> to vector<2x32xf32>
    %265 = arith.mulf %262, %238 : vector<2x32xf32>
    %266 = arith.mulf %261, %264 : vector<2x32xf32>
    %267 = arith.addf %265, %266 : vector<2x32xf32>
    %268 = math.tanh %267 : vector<2x32xf32>
    %269 = arith.mulf %263, %268 : vector<2x32xf32>
    %270 = arith.addi %5, %c6_i32 : i32
    %271 = vector.broadcast %270 : i32 to vector<2x1xi32>
    %272 = arith.cmpi sgt, %4, %271 : vector<2x1xi32>
    %273 = vector.shape_cast %272 : vector<2x1xi1> to vector<2x1xi1>
    %274 = vector.broadcast %273 : vector<2x1xi1> to vector<2x32xi1>
    %275 = arith.select %274, %269, %235 : vector<2x32xi1>, vector<2x32xf32>
    %276 = vector.shape_cast %272 : vector<2x1xi1> to vector<2x1xi1>
    %277 = vector.broadcast %276 : vector<2x1xi1> to vector<2x32xi1>
    %278 = arith.select %277, %267, %238 : vector<2x32xi1>, vector<2x32xf32>
    %cst_64 = arith.constant 0.000000e+00 : f32
    %279 = vector.shape_cast %272 : vector<2x1xi1> to vector<2x1xi1>
    %280 = vector.broadcast %279 : vector<2x1xi1> to vector<2x32xi1>
    %281 = vector.broadcast %cst_64 : f32 to vector<2x32xf32>
    %282 = arith.select %280, %269, %281 : vector<2x32xi1>, vector<2x32xf32>
    %cst_65 = arith.constant dense<0.000000e+00> : vector<2x128xf32>
    %283 = tpu.matmul %282, %6, %cst_65 {dimension_numbers = #tpu.dot_dimension_numbers<[1], [0], [0], [1], [0, 0, 1, 1], [], []>} : vector<2x32xf32>, vector<32x128xf32>, vector<2x128xf32> -> vector<2x128xf32>
    %284 = vector.broadcast %7 : vector<1x128xf32> to vector<2x128xf32>
    %285 = arith.addf %283, %284 : vector<2x128xf32>
    %286 = arith.index_cast %c6_i32 : i32 to index
    %c0_66 = arith.constant 0 : index
    %c0_67 = arith.constant 0 : index
    %287 = vector.load %arg7[%286, %c0_66, %c0_67] : memref<8x2x128xf32, #tpu.memory_space<vmem>>, vector<1x2x128xf32>
    %288 = vector.shape_cast %287 : vector<1x2x128xf32> to vector<2x128xf32>
    %289 = vector.shape_cast %285 : vector<2x128xf32> to vector<1x2x128xf32>
    tpu.vector_store %arg7[%286, %c0_66, %c0_67], %289 {strides = array<i32>} : memref<8x2x128xf32, #tpu.memory_space<vmem>>, vector<1x2x128xf32>,
    %c7_i32 = arith.constant 7 : i32
    %290 = arith.index_cast %c7_i32 : i32 to index
    %c0_68 = arith.constant 0 : index
    %c0_69 = arith.constant 0 : index
    %291 = vector.load %arg2[%290, %c0_68, %c0_69] : memref<8x2x128xf32, #tpu.memory_space<vmem>>, vector<1x2x128xf32>
    %292 = vector.shape_cast %291 : vector<1x2x128xf32> to vector<2x128xf32>
    %cst_70 = arith.constant dense<0.000000e+00> : vector<2x128xf32>
    %293 = tpu.matmul %275, %3, %cst_70 {dimension_numbers = #tpu.dot_dimension_numbers<[1], [0], [0], [1], [0, 0, 1, 1], [], []>} : vector<2x32xf32>, vector<32x128xf32>, vector<2x128xf32> -> vector<2x128xf32>
    %294 = arith.addf %292, %293 : vector<2x128xf32>
    %295 = arith.negf %294 : vector<2x128xf32>
    %296 = math.exp %295 : vector<2x128xf32>
    %cst_71 = arith.constant 1.000000e+00 : f32
    %297 = vector.broadcast %cst_71 : f32 to vector<2x128xf32>
    %298 = arith.addf %297, %296 : vector<2x128xf32>
    %299 = arith.divf %297, %298 : vector<2x128xf32>
    %300 = math.tanh %294 : vector<2x128xf32>
    %301 = vector.extract_strided_slice %299 {offsets = [0, 0], sizes = [2, 32], strides = [1, 1]} : vector<2x128xf32> to vector<2x32xf32>
    %302 = vector.extract_strided_slice %299 {offsets = [0, 32], sizes = [2, 32], strides = [1, 1]} : vector<2x128xf32> to vector<2x32xf32>
    %303 = vector.extract_strided_slice %299 {offsets = [0, 96], sizes = [2, 32], strides = [1, 1]} : vector<2x128xf32> to vector<2x32xf32>
    %304 = vector.extract_strided_slice %300 {offsets = [0, 64], sizes = [2, 32], strides = [1, 1]} : vector<2x128xf32> to vector<2x32xf32>
    %305 = arith.mulf %302, %278 : vector<2x32xf32>
    %306 = arith.mulf %301, %304 : vector<2x32xf32>
    %307 = arith.addf %305, %306 : vector<2x32xf32>
    %308 = math.tanh %307 : vector<2x32xf32>
    %309 = arith.mulf %303, %308 : vector<2x32xf32>
    %310 = arith.addi %5, %c7_i32 : i32
    %311 = vector.broadcast %310 : i32 to vector<2x1xi32>
    %312 = arith.cmpi sgt, %4, %311 : vector<2x1xi32>
    %313 = vector.shape_cast %312 : vector<2x1xi1> to vector<2x1xi1>
    %314 = vector.broadcast %313 : vector<2x1xi1> to vector<2x32xi1>
    %315 = arith.select %314, %309, %275 : vector<2x32xi1>, vector<2x32xf32>
    %316 = vector.shape_cast %312 : vector<2x1xi1> to vector<2x1xi1>
    %317 = vector.broadcast %316 : vector<2x1xi1> to vector<2x32xi1>
    %318 = arith.select %317, %307, %278 : vector<2x32xi1>, vector<2x32xf32>
    %cst_72 = arith.constant 0.000000e+00 : f32
    %319 = vector.shape_cast %312 : vector<2x1xi1> to vector<2x1xi1>
    %320 = vector.broadcast %319 : vector<2x1xi1> to vector<2x32xi1>
    %321 = vector.broadcast %cst_72 : f32 to vector<2x32xf32>
    %322 = arith.select %320, %309, %321 : vector<2x32xi1>, vector<2x32xf32>
    %cst_73 = arith.constant dense<0.000000e+00> : vector<2x128xf32>
    %323 = tpu.matmul %322, %6, %cst_73 {dimension_numbers = #tpu.dot_dimension_numbers<[1], [0], [0], [1], [0, 0, 1, 1], [], []>} : vector<2x32xf32>, vector<32x128xf32>, vector<2x128xf32> -> vector<2x128xf32>
    %324 = vector.broadcast %7 : vector<1x128xf32> to vector<2x128xf32>
    %325 = arith.addf %323, %324 : vector<2x128xf32>
    %326 = arith.index_cast %c7_i32 : i32 to index
    %c0_74 = arith.constant 0 : index
    %c0_75 = arith.constant 0 : index
    %327 = vector.load %arg7[%326, %c0_74, %c0_75] : memref<8x2x128xf32, #tpu.memory_space<vmem>>, vector<1x2x128xf32>
    %328 = vector.shape_cast %327 : vector<1x2x128xf32> to vector<2x128xf32>
    %329 = vector.shape_cast %325 : vector<2x128xf32> to vector<1x2x128xf32>
    tpu.vector_store %arg7[%326, %c0_74, %c0_75], %329 {strides = array<i32>} : memref<8x2x128xf32, #tpu.memory_space<vmem>>, vector<1x2x128xf32>,
    %c8_i32_76 = arith.constant 8 : i32
    %c0_77 = arith.constant 0 : index
    %c0_78 = arith.constant 0 : index
    %330 = vector.load %arg8[%c0_77, %c0_78] : memref<2x32xf32, #tpu.memory_space<vmem>>, vector<2x32xf32>
    tpu.vector_store %arg8[%c0_77, %c0_78], %315 {strides = array<i32>} : memref<2x32xf32, #tpu.memory_space<vmem>>, vector<2x32xf32>,
    %c0_79 = arith.constant 0 : index
    %c0_80 = arith.constant 0 : index
    %331 = vector.load %arg9[%c0_79, %c0_80] : memref<2x32xf32, #tpu.memory_space<vmem>>, vector<2x32xf32>
    tpu.vector_store %arg9[%c0_79, %c0_80], %318 {strides = array<i32>} : memref<2x32xf32, #tpu.memory_space<vmem>>, vector<2x32xf32>,
    return
  }
  func.func @transform_0(%arg0: i32) -> (i32, i32) {
    %c0_i32 = arith.constant 0 : i32
    %c0_i32_0 = arith.constant 0 : i32
    %c0_i32_1 = arith.constant 0 : i32
    return %c0_i32, %c0_i32_0 : i32, i32
  }
  func.func @transform_1(%arg0: i32) -> (i32, i32, i32) {
    %c0_i32 = arith.constant 0 : i32
    %c0_i32_0 = arith.constant 0 : i32
    %c0_i32_1 = arith.constant 0 : i32
    return %arg0, %c0_i32, %c0_i32_0 : i32, i32, i32
  }
  func.func @transform_2(%arg0: i32) -> (i32, i32) {
    %c0_i32 = arith.constant 0 : i32
    %c0_i32_0 = arith.constant 0 : i32
    %c0_i32_1 = arith.constant 0 : i32
    return %c0_i32, %c0_i32_0 : i32, i32
  }
  func.func @transform_3(%arg0: i32) -> (i32, i32) {
    %c0_i32 = arith.constant 0 : i32
    %c0_i32_0 = arith.constant 0 : i32
    %c0_i32_1 = arith.constant 0 : i32
    return %c0_i32, %c0_i32_0 : i32, i32
  }
  func.func @transform_4(%arg0: i32) -> (i32, i32) {
    %c0_i32 = arith.constant 0 : i32
    %c0_i32_0 = arith.constant 0 : i32
    %c0_i32_1 = arith.constant 0 : i32
    return %c0_i32, %c0_i32_0 : i32, i32
  }
  func.func @transform_5(%arg0: i32) -> (i32, i32) {
    %c0_i32 = arith.constant 0 : i32
    %c0_i32_0 = arith.constant 0 : i32
    %c0_i32_1 = arith.constant 0 : i32
    return %c0_i32, %c0_i32_0 : i32, i32
  }
  func.func @transform_6(%arg0: i32) -> (i32, i32, i32) {
    %c0_i32 = arith.constant 0 : i32
    %c0_i32_0 = arith.constant 0 : i32
    %c0_i32_1 = arith.constant 0 : i32
    return %arg0, %c0_i32, %c0_i32_0 : i32, i32, i32
  }
}

</mosaic_0001>

<llo_original>
// kernel: tpu_custom_call.1
$region0: #{tpu_custom_call.1}
  #allocation0 [shape = 'u32[]', space=smem, size = 0x4, offset = 0x4, fixed_abs, tag = 'smem constant byte address 0x4 - core index']
  #allocation1 [shape = 'u32[144,128]{1,0:T(1,128)}', space=vmem, size = 0x12000, scoped, tag = 'internal scratch']
  #allocation2 [shape = 'f32[2,32]{1,0:T(2,128)}', space=vmem, size = 0x400, scoped, tag = 'scratch operand']
  #allocation3 [shape = 'f32[2,32]{1,0:T(2,128)}', space=vmem, size = 0x400, scoped, tag = 'scratch operand']
  %s0 = inlined_call_operand.vmem [shape: s32[2,1], index: 0, kind: input, shape index: {}]
  %s1 = inlined_call_operand.hbm [shape: f32[8,2,128], index: 1, kind: input, shape index: {}]
  %s2 = inlined_call_operand.hbm [shape: f32[32,128], index: 2, kind: input, shape index: {}]
  %s3 = inlined_call_operand.vmem [shape: f32[2,32], index: 3, kind: input, shape index: {}]
  %s4 = inlined_call_operand.hbm [shape: f32[32,128], index: 4, kind: input, shape index: {}]
  %s5 = inlined_call_operand.vmem [shape: f32[1,128], index: 5, kind: input, shape index: {}]
  %s6 = inlined_call_operand.hbm [shape: f32[8,2,128], index: 6, kind: output, shape index: {}]
  %s7 = sld [smem:[#allocation0]]
  $region50: #{tpu_custom_call.1} parent=0
    _
  %s9 = ssub.s32 1, %s7
  %s10 = scalar_select 0, %s9, %s7
  $region1: #{tpu_custom_call.1} parent=0
    #allocation4 [shape = 'u8[8192]{0}', space=vmem, size = 0x2000, scoped, tag = 'input window, operand 1, single buffered']
    #allocation5 [shape = 's32[1]{0}', space=sflag, size = 0x4, scoped, tag = 'scoped memory for tpu_custom_call.1']
    #allocation6 [shape = 's32[1]{0}', space=sflag, size = 0x4, scoped, tag = 'scoped memory for tpu_custom_call.1']
    #allocation7 [shape = 'u8[16384]{0}', space=vmem, size = 0x4000, scoped, tag = 'input window, operand 2, single buffered']
    #allocation8 [shape = 's32[1]{0}', space=sflag, size = 0x4, scoped, tag = 'scoped memory for tpu_custom_call.1']
    #allocation9 [shape = 'u8[16384]{0}', space=vmem, size = 0x4000, scoped, tag = 'input window, operand 4, single buffered']
    #allocation10 [shape = 'u8[8192]{0}', space=vmem, size = 0x2000, scoped, tag = 'output window, operand 0, single buffered']
    %11 = vsyncpa [#allocation5], 0
    %12 = vsyncpa [#allocation8], 0
    %13 = vsyncpa [#allocation6], 0
    // Predicated region
    $region2: #{tpu_custom_call.1} parent=1 // pred_check
      _
    $region3: #{tpu_custom_call.1} parent=1 // pred_check_branch
      %15 = sbr.rel (0) target = $region5
    $region4: #{tpu_custom_call.1} parent=1 // pred_region
      _
    $region5: #{tpu_custom_call.1} parent=1 // pred_fallthru
      _
    // Predicated region
    $region6: #{tpu_custom_call.1} parent=1 // pred_check
      _
    $region7: #{tpu_custom_call.1} parent=1 // pred_check_branch
      %17 = sbr.rel (0) target = $region9
    $region8: #{tpu_custom_call.1} parent=1 // pred_region
      %s19 = ssub.s32 256, 256
      %20 = vsyncadd [#allocation5], %s19
      %s21 = sshll.u32 [#allocation4], 4
      %s22 = int_to_ptr.vmem [resolvable:$true] %s21
      %27 = dma.hbm_to_vmem [thread:$0]  %s1, 256, %s22, [#allocation5], 32, 32, 2
    $region9: #{tpu_custom_call.1} parent=1 // pred_fallthru
      _
    // Predicated region
    $region10: #{tpu_custom_call.1} parent=1 // pred_check
      _
    $region11: #{tpu_custom_call.1} parent=1 // pred_check_branch
      %29 = sbr.rel (0) target = $region13
    $region12: #{tpu_custom_call.1} parent=1 // pred_region
      %s31 = ssub.s32 512, 512
      %32 = vsyncadd [#allocation8], %s31
      %s33 = sshll.u32 [#allocation7], 4
      %s34 = int_to_ptr.vmem [resolvable:$true] %s33
      %39 = dma.hbm_to_vmem [thread:$0]  %s2, 512, %s34, [#allocation8], 128, 128, 8
    $region13: #{tpu_custom_call.1} parent=1 // pred_fallthru
      _
    // Predicated region
    $region14: #{tpu_custom_call.1} parent=1 // pred_check
      _
    $region15: #{tpu_custom_call.1} parent=1 // pred_check_branch
      %41 = sbr.rel (0) target = $region17
    $region16: #{tpu_custom_call.1} parent=1 // pred_region
      _
    $region17: #{tpu_custom_call.1} parent=1 // pred_fallthru
      _
    // Predicated region
    $region18: #{tpu_custom_call.1} parent=1 // pred_check
      _
    $region19: #{tpu_custom_call.1} parent=1 // pred_check_branch
      %43 = sbr.rel (0) target = $region21
    $region20: #{tpu_custom_call.1} parent=1 // pred_region
      %s45 = ssub.s32 512, 512
      %46 = vsyncadd [#allocation8], %s45
      %s47 = sshll.u32 [#allocation9], 4
      %s48 = int_to_ptr.vmem [resolvable:$true] %s47
      %53 = dma.hbm_to_vmem [thread:$0]  %s4, 512, %s48, [#allocation8], 128, 128, 8
    $region21: #{tpu_custom_call.1} parent=1 // pred_fallthru
      _
    // Predicated region
    $region22: #{tpu_custom_call.1} parent=1 // pred_check
      _
    $region23: #{tpu_custom_call.1} parent=1 // pred_check_branch
      %55 = sbr.rel (0) target = $region25
    $region24: #{tpu_custom_call.1} parent=1 // pred_region
      _
    $region25: #{tpu_custom_call.1} parent=1 // pred_fallthru
      _
    // Predicated region
    $region26: #{tpu_custom_call.1} parent=1 // pred_check
      _
    $region27: #{tpu_custom_call.1} parent=1 // pred_check_branch
      %57 = sbr.rel (0) target = $region29
    $region28: #{tpu_custom_call.1} parent=1 // pred_region
      %58 = dma.done [#allocation5], 256
    $region29: #{tpu_custom_call.1} parent=1 // pred_fallthru
      _
    // Predicated region
    $region30: #{tpu_custom_call.1} parent=1 // pred_check
      _
    $region31: #{tpu_custom_call.1} parent=1 // pred_check_branch
      %60 = sbr.rel (0) target = $region33
    $region32: #{tpu_custom_call.1} parent=1 // pred_region
      %61 = dma.done [#allocation8], 512
    $region33: #{tpu_custom_call.1} parent=1 // pred_fallthru
      _
    // Predicated region
    $region34: #{tpu_custom_call.1} parent=1 // pred_check
      _
    $region35: #{tpu_custom_call.1} parent=1 // pred_check_branch
      %63 = sbr.rel (0) target = $region37
    $region36: #{tpu_custom_call.1} parent=1 // pred_region
      %64 = dma.done [#allocation8], 512
    $region37: #{tpu_custom_call.1} parent=1 // pred_fallthru
      _
    %p65 = scmp.eq.s32.totalorder 0, 0
    // Predicated region
    $region38: #{tpu_custom_call.1} parent=1 // pred_check
      %p66 = pneg %p65
    $region39: #{tpu_custom_call.1} parent=1 // pred_check_branch
      %68 = sbr.rel (%p66) target = $region41
    $region40: #{tpu_custom_call.1} parent=1 // pred_region
      %v69 = vld [vmem:[%s3] sm:$0x3]
      %vm70 = vcmask 254976
      %71 = vst.msk [vmem:[#allocation2] sm:$0x3] %vm70, %v69
      %v72 = vld [vmem:[%s3] sm:$0x3]
      %73 = vst.msk [vmem:[#allocation3] sm:$0x3] %vm70, %v72
    $region41: #{tpu_custom_call.1} parent=1 // pred_fallthru
      _
    %v74 = vld [vmem:[#allocation7] sm:$0xff]
    %v75 = vld [vmem:[#allocation7 + $0x8] sm:$0xff]
    %v76 = vld [vmem:[#allocation7 + $0x10] sm:$0xff]
    %v77 = vld [vmem:[#allocation7 + $0x18] sm:$0xff]
    %v78 = vld [vmem:[%s0] sm:$0x3]
    %s79 = smul.u32 0, 8
    %v80 = vld [vmem:[#allocation9] sm:$0xff]
    %v81 = vld [vmem:[#allocation9 + $0x8] sm:$0xff]
    %v82 = vld [vmem:[#allocation9 + $0x10] sm:$0xff]
    %v83 = vld [vmem:[#allocation9 + $0x18] sm:$0xff]
    %v84 = vld [vmem:[%s5] sm:$0x1]
    %v85 = vld [vmem:[#allocation2] sm:$0x3]
    %v86 = vld [vmem:[#allocation3] sm:$0x3]
    %v87 = vld [vmem:[#allocation4] sm:$0x3]
    %vm88 = vcmask 261120
    %v90 = vsel %vm88, %v85, 0
    %92 = vmatprep.subr.mxu0 0.0
    %93 = vmatpush1.msra.mxu0 0.0
    %94 = vmatprep.subr.mxu0 0.0
    %95 = vmatpush1.msra.mxu0 0.0
    %96 = vmatprep.subr.mxu0 0.0
    %97 = vmatpush1.msra.mxu0 0.0
    %98 = vmatprep.subr.mxu0 0.0
    %99 = vmatpush1.msra.mxu0 0.0
    %100 = vmatprep.subr.mxu0 0.0
    %101 = vmatpush1.msra.mxu0 0.0
    %102 = vmatprep.subr.mxu0 0.0
    %103 = vmatpush1.msra.mxu0 0.0
    %104 = vmatprep.subr.mxu0 0.0
    %105 = vmatpush1.msra.mxu0 0.0
    %106 = vmatprep.subr.mxu0 0.0
    %107 = vmatpush1.msra.mxu0 0.0
    %108 = vmatprep.subr.mxu0 0.0
    %109 = vmatpush1.msra.mxu0 0.0
    %110 = vmatprep.subr.mxu0 0.0
    %111 = vmatpush1.msra.mxu0 0.0
    %112 = vmatprep.subr.mxu0 0.0
    %113 = vmatpush1.msra.mxu0 0.0
    %114 = vmatprep.subr.mxu0 0.0
    %115 = vmatpush1.msra.mxu0 0.0
    %116 = vmatprep.subr.mxu0 0.0
    %117 = vmatpush1.msra.mxu0 %v77
    %118 = vmatprep.subr.mxu0 0.0
    %119 = vmatpush1.msra.mxu0 %v76
    %120 = vmatprep.subr.mxu0 0.0
    %121 = vmatpush1.msra.mxu0 %v75
    %122 = vmatprep.subr.mxu0 0.0
    %123 = vmatpush1.msra.mxu0 %v74
    %124 = vmatprep.subr.mxu0 0.0
    %125 = vmatpush2.msra.mxu0 0.0
    %126 = vmatprep.subr.mxu0 0.0
    %127 = vmatpush2.msra.mxu0 0.0
    %128 = vmatprep.subr.mxu0 0.0
    %129 = vmatpush2.msra.mxu0 0.0
    %130 = vmatprep.subr.mxu0 0.0
    %131 = vmatpush2.msra.mxu0 0.0
    %132 = vmatprep.subr.mxu0 0.0
    %133 = vmatpush2.msra.mxu0 0.0
    %134 = vmatprep.subr.mxu0 0.0
    %135 = vmatpush2.msra.mxu0 0.0
    %136 = vmatprep.subr.mxu0 0.0
    %137 = vmatpush2.msra.mxu0 0.0
    %138 = vmatprep.subr.mxu0 0.0
    %139 = vmatpush2.msra.mxu0 0.0
    %140 = vmatprep.subr.mxu0 0.0
    %141 = vmatpush2.msra.mxu0 0.0
    %142 = vmatprep.subr.mxu0 0.0
    %143 = vmatpush2.msra.mxu0 0.0
    %144 = vmatprep.subr.mxu0 0.0
    %145 = vmatpush2.msra.mxu0 0.0
    %146 = vmatprep.subr.mxu0 0.0
    %147 = vmatpush2.msra.mxu0 0.0
    %148 = vmatprep.subr.mxu0 0.0
    %149 = vmatpush2.msra.mxu0 0.0
    %150 = vmatprep.subr.mxu0 0.0
    %151 = vmatpush2.msra.mxu0 0.0
    %152 = vmatprep.subr.mxu0 0.0
    %153 = vmatpush2.msra.mxu0 0.0
    %154 = vmatprep.subr.mxu0 0.0
    %155 = vmatpush2.msra.mxu0 0.0
    %156 = vmatprep.mubr.f32.mxu0 0.0
    %157 = vmatmul.mubr.f32.gmra.mxu0 %v90
    %v158 = vpop.f32.mrf.mxu0
    %v159 = vadd.f32 0.0, %v158
    %v160 = vpop.f32.mrf.mxu0
    %161 = vdwg.mxu0
    %v162 = vadd.f32 %v87, %v159
    %v163 = vxor.u32 %v162, 2147483648
    %v164 = vmul.f32 %v163, 1.442695
    %v165 = vpow.pop %v164
    %v166 = vadd.f32 %v165, 1.0
    %v167 = vrcp.pop %v166
    %v168 = vmul.f32 1.0, %v167
    %v169 = vtanh.pop %v162
    %171 = vrot.lane.b32.xlu0 %v86, 32
    %v172 = vpop.permute.xlu0 %171
    %v174 = vmul.f32 %v168, %v172
    %176 = vrot.lane.b32.xlu0 %v169, 64
    %v177 = vpop.permute.xlu0 %176
    %v179 = vmul.f32 %v168, %v177
    %181 = vrot.lane.b32.xlu0 %v179, 32
    %v182 = vpop.permute.xlu0 %181
    %v184 = vadd.f32 %v174, %v182
    %v185 = vtanh.pop %v184
    %187 = vrot.lane.b32.xlu0 %v185, 64
    %v188 = vpop.permute.xlu0 %187
    %v190 = vmul.f32 %v168, %v188
    %v191 = vstv %s79
    %vm192 = vcmp.gt.s32.totalorder %v78, %v191
    %v193 = vsel %vm192, 1, 0
    %194 = vset.pattern.permute.xlu0 0
    %195 = vperm.xlu0 %194, %v193
    %v196 = vpop.permute.xlu0 %195
    %vm197 = vcmp.eq.s32.totalorder %v196, 1
    %198 = vrot.lane.b32.xlu0 %v85, 96
    %v199 = vpop.permute.xlu0 %198
    %v201 = vsel %vm197, %v190, %v199
    %v202 = vsel %vm197, %v184, %v172
    %v203 = vsel %vm197, %v190, 0.0
    %v205 = vlaneseq
    %v206 = vshrl.u32 %v205, 7
    %v207 = vsub.s32 0, %v206
    %v208 = vrot.slane %v84, %v207
    %211 = vrot.lane.b32.xlu0 %v203, 32
    %v212 = vpop.permute.xlu0 %211
    %v213 = vsel %vm88, %v212, 0
    %215 = vmatprep.subr.mxu0 0.0
    %216 = vmatpush1.msra.mxu0 0.0
    %217 = vmatprep.subr.mxu0 0.0
    %218 = vmatpush1.msra.mxu0 0.0
    %219 = vmatprep.subr.mxu0 0.0
    %220 = vmatpush1.msra.mxu0 0.0
    %221 = vmatprep.subr.mxu0 0.0
    %222 = vmatpush1.msra.mxu0 0.0
    %223 = vmatprep.subr.mxu0 0.0
    %224 = vmatpush1.msra.mxu0 0.0
    %225 = vmatprep.subr.mxu0 0.0
    %226 = vmatpush1.msra.mxu0 0.0
    %227 = vmatprep.subr.mxu0 0.0
    %228 = vmatpush1.msra.mxu0 0.0
    %229 = vmatprep.subr.mxu0 0.0
    %230 = vmatpush1.msra.mxu0 0.0
    %231 = vmatprep.subr.mxu0 0.0
    %232 = vmatpush1.msra.mxu0 0.0
    %233 = vmatprep.subr.mxu0 0.0
    %234 = vmatpush1.msra.mxu0 0.0
    %235 = vmatprep.subr.mxu0 0.0
    %236 = vmatpush1.msra.mxu0 0.0
    %237 = vmatprep.subr.mxu0 0.0
    %238 = vmatpush1.msra.mxu0 0.0
    %239 = vmatprep.subr.mxu0 0.0
    %240 = vmatpush1.msra.mxu0 %v83
    %241 = vmatprep.subr.mxu0 0.0
    %242 = vmatpush1.msra.mxu0 %v82
    %243 = vmatprep.subr.mxu0 0.0
    %244 = vmatpush1.msra.mxu0 %v81
    %245 = vmatprep.subr.mxu0 0.0
    %246 = vmatpush1.msra.mxu0 %v80
    %247 = vmatprep.subr.mxu0 0.0
    %248 = vmatpush2.msra.mxu0 0.0
    %249 = vmatprep.subr.mxu0 0.0
    %250 = vmatpush2.msra.mxu0 0.0
    %251 = vmatprep.subr.mxu0 0.0
    %252 = vmatpush2.msra.mxu0 0.0
    %253 = vmatprep.subr.mxu0 0.0
    %254 = vmatpush2.msra.mxu0 0.0
    %255 = vmatprep.subr.mxu0 0.0
    %256 = vmatpush2.msra.mxu0 0.0
    %257 = vmatprep.subr.mxu0 0.0
    %258 = vmatpush2.msra.mxu0 0.0
    %259 = vmatprep.subr.mxu0 0.0
    %260 = vmatpush2.msra.mxu0 0.0
    %261 = vmatprep.subr.mxu0 0.0
    %262 = vmatpush2.msra.mxu0 0.0
    %263 = vmatprep.subr.mxu0 0.0
    %264 = vmatpush2.msra.mxu0 0.0
    %265 = vmatprep.subr.mxu0 0.0
    %266 = vmatpush2.msra.mxu0 0.0
    %267 = vmatprep.subr.mxu0 0.0
    %268 = vmatpush2.msra.mxu0 0.0
    %269 = vmatprep.subr.mxu0 0.0
    %270 = vmatpush2.msra.mxu0 0.0
    %271 = vmatprep.subr.mxu0 0.0
    %272 = vmatpush2.msra.mxu0 0.0
    %273 = vmatprep.subr.mxu0 0.0
    %274 = vmatpush2.msra.mxu0 0.0
    %275 = vmatprep.subr.mxu0 0.0
    %276 = vmatpush2.msra.mxu0 0.0
    %277 = vmatprep.subr.mxu0 0.0
    %278 = vmatpush2.msra.mxu0 0.0
    %279 = vmatprep.mubr.f32.mxu0 0.0
    %280 = vmatmul.mubr.f32.gmra.mxu0 %v213
    %v281 = vpop.f32.mrf.mxu0
    %v282 = vadd.f32 %v208, %v281
    %v283 = vpop.f32.mrf.mxu0
    %284 = vdwg.mxu0
    %285 = vst [vmem:[#allocation10] sm:$0x3] %v282
    %s286 = scalar_lea.vmem [#allocation4], 2
    %v287 = vld [vmem:[%s286] sm:$0x3]
    %289 = vrot.lane.b32.xlu0 %v201, 32
    %v290 = vpop.permute.xlu0 %289
    %v291 = vsel %vm88, %v290, 0
    %293 = vmatprep.subr.mxu0 0.0
    %294 = vmatpush1.msra.mxu0 0.0
    %295 = vmatprep.subr.mxu0 0.0
    %296 = vmatpush1.msra.mxu0 0.0
    %297 = vmatprep.subr.mxu0 0.0
    %298 = vmatpush1.msra.mxu0 0.0
    %299 = vmatprep.subr.mxu0 0.0
    %300 = vmatpush1.msra.mxu0 0.0
    %301 = vmatprep.subr.mxu0 0.0
    %302 = vmatpush1.msra.mxu0 0.0
    %303 = vmatprep.subr.mxu0 0.0
    %304 = vmatpush1.msra.mxu0 0.0
    %305 = vmatprep.subr.mxu0 0.0
    %306 = vmatpush1.msra.mxu0 0.0
    %307 = vmatprep.subr.mxu0 0.0
    %308 = vmatpush1.msra.mxu0 0.0
    %309 = vmatprep.subr.mxu0 0.0
    %310 = vmatpush1.msra.mxu0 0.0
    %311 = vmatprep.subr.mxu0 0.0
    %312 = vmatpush1.msra.mxu0 0.0
    %313 = vmatprep.subr.mxu0 0.0
    %314 = vmatpush1.msra.mxu0 0.0
    %315 = vmatprep.subr.mxu0 0.0
    %316 = vmatpush1.msra.mxu0 0.0
    %317 = vmatprep.subr.mxu0 0.0
    %318 = vmatpush1.msra.mxu0 %v77
    %319 = vmatprep.subr.mxu0 0.0
    %320 = vmatpush1.msra.mxu0 %v76
    %321 = vmatprep.subr.mxu0 0.0
    %322 = vmatpush1.msra.mxu0 %v75
    %323 = vmatprep.subr.mxu0 0.0
    %324 = vmatpush1.msra.mxu0 %v74
    %325 = vmatprep.subr.mxu0 0.0
    %326 = vmatpush2.msra.mxu0 0.0
    %327 = vmatprep.subr.mxu0 0.0
    %328 = vmatpush2.msra.mxu0 0.0
    %329 = vmatprep.subr.mxu0 0.0
    %330 = vmatpush2.msra.mxu0 0.0
    %331 = vmatprep.subr.mxu0 0.0
    %332 = vmatpush2.msra.mxu0 0.0
    %333 = vmatprep.subr.mxu0 0.0
    %334 = vmatpush2.msra.mxu0 0.0
    %335 = vmatprep.subr.mxu0 0.0
    %336 = vmatpush2.msra.mxu0 0.0
    %337 = vmatprep.subr.mxu0 0.0
    %338 = vmatpush2.msra.mxu0 0.0
    %339 = vmatprep.subr.mxu0 0.0
    %340 = vmatpush2.msra.mxu0 0.0
    %341 = vmatprep.subr.mxu0 0.0
    %342 = vmatpush2.msra.mxu0 0.0
    %343 = vmatprep.subr.mxu0 0.0
    %344 = vmatpush2.msra.mxu0 0.0
    %345 = vmatprep.subr.mxu0 0.0
    %346 = vmatpush2.msra.mxu0 0.0
    %347 = vmatprep.subr.mxu0 0.0
    %348 = vmatpush2.msra.mxu0 0.0
    %349 = vmatprep.subr.mxu0 0.0
    %350 = vmatpush2.msra.mxu0 0.0
    %351 = vmatprep.subr.mxu0 0.0
    %352 = vmatpush2.msra.mxu0 0.0
    %353 = vmatprep.subr.mxu0 0.0
    %354 = vmatpush2.msra.mxu0 0.0
    %355 = vmatprep.subr.mxu0 0.0
    %356 = vmatpush2.msra.mxu0 0.0
    %357 = vmatprep.mubr.f32.mxu0 0.0
    %358 = vmatmul.mubr.f32.gmra.mxu0 %v291
    %v359 = vpop.f32.mrf.mxu0
    %v360 = vadd.f32 0.0, %v359
    %v361 = vpop.f32.mrf.mxu0
    %362 = vdwg.mxu0
    %v363 = vadd.f32 %v287, %v360
    %v364 = vxor.u32 %v363, 2147483648
    %v365 = vmul.f32 %v364, 1.442695
    %v366 = vpow.pop %v365
    %v367 = vadd.f32 %v366, 1.0
    %v368 = vrcp.pop %v367
    %v369 = vmul.f32 1.0, %v368
    %v370 = vtanh.pop %v363
    %v371 = vmul.f32 %v369, %v202
    %373 = vrot.lane.b32.xlu0 %v370, 64
    %v374 = vpop.permute.xlu0 %373
    %v376 = vmul.f32 %v369, %v374
    %378 = vrot.lane.b32.xlu0 %v376, 32
    %v379 = vpop.permute.xlu0 %378
    %v381 = vadd.f32 %v371, %v379
    %v382 = vtanh.pop %v381
    %384 = vrot.lane.b32.xlu0 %v382, 64
    %v385 = vpop.permute.xlu0 %384
    %v387 = vmul.f32 %v369, %v385
    %s388 = sadd.s32 %s79, 1
    %v389 = vstv %s388
    %vm390 = vcmp.gt.s32.totalorder %v78, %v389
    %v391 = vsel %vm390, 1, 0
    %392 = vset.pattern.permute.xlu0 0
    %393 = vperm.xlu0 %392, %v391
    %v394 = vpop.permute.xlu0 %393
    %vm395 = vcmp.eq.s32.totalorder %v394, 1
    %v396 = vsel %vm395, %v387, %v201
    %v397 = vsel %vm395, %v381, %v202
    %v398 = vsel %vm395, %v387, 0.0
    %400 = vrot.lane.b32.xlu0 %v398, 32
    %v401 = vpop.permute.xlu0 %400
    %v402 = vsel %vm88, %v401, 0
    %404 = vmatprep.subr.mxu0 0.0
    %405 = vmatpush1.msra.mxu0 0.0
    %406 = vmatprep.subr.mxu0 0.0
    %407 = vmatpush1.msra.mxu0 0.0
    %408 = vmatprep.subr.mxu0 0.0
    %409 = vmatpush1.msra.mxu0 0.0
    %410 = vmatprep.subr.mxu0 0.0
    %411 = vmatpush1.msra.mxu0 0.0
    %412 = vmatprep.subr.mxu0 0.0
    %413 = vmatpush1.msra.mxu0 0.0
    %414 = vmatprep.subr.mxu0 0.0
    %415 = vmatpush1.msra.mxu0 0.0
    %416 = vmatprep.subr.mxu0 0.0
    %417 = vmatpush1.msra.mxu0 0.0
    %418 = vmatprep.subr.mxu0 0.0
    %419 = vmatpush1.msra.mxu0 0.0
    %420 = vmatprep.subr.mxu0 0.0
    %421 = vmatpush1.msra.mxu0 0.0
    %422 = vmatprep.subr.mxu0 0.0
    %423 = vmatpush1.msra.mxu0 0.0
    %424 = vmatprep.subr.mxu0 0.0
    %425 = vmatpush1.msra.mxu0 0.0
    %426 = vmatprep.subr.mxu0 0.0
    %427 = vmatpush1.msra.mxu0 0.0
    %428 = vmatprep.subr.mxu0 0.0
    %429 = vmatpush1.msra.mxu0 %v83
    %430 = vmatprep.subr.mxu0 0.0
    %431 = vmatpush1.msra.mxu0 %v82
    %432 = vmatprep.subr.mxu0 0.0
    %433 = vmatpush1.msra.mxu0 %v81
    %434 = vmatprep.subr.mxu0 0.0
    %435 = vmatpush1.msra.mxu0 %v80
    %436 = vmatprep.subr.mxu0 0.0
    %437 = vmatpush2.msra.mxu0 0.0
    %438 = vmatprep.subr.mxu0 0.0
    %439 = vmatpush2.msra.mxu0 0.0
    %440 = vmatprep.subr.mxu0 0.0
    %441 = vmatpush2.msra.mxu0 0.0
    %442 = vmatprep.subr.mxu0 0.0
    %443 = vmatpush2.msra.mxu0 0.0
    %444 = vmatprep.subr.mxu0 0.0
    %445 = vmatpush2.msra.mxu0 0.0
    %446 = vmatprep.subr.mxu0 0.0
    %447 = vmatpush2.msra.mxu0 0.0
    %448 = vmatprep.subr.mxu0 0.0
    %449 = vmatpush2.msra.mxu0 0.0
    %450 = vmatprep.subr.mxu0 0.0
    %451 = vmatpush2.msra.mxu0 0.0
    %452 = vmatprep.subr.mxu0 0.0
    %453 = vmatpush2.msra.mxu0 0.0
    %454 = vmatprep.subr.mxu0 0.0
    %455 = vmatpush2.msra.mxu0 0.0
    %456 = vmatprep.subr.mxu0 0.0
    %457 = vmatpush2.msra.mxu0 0.0
    %458 = vmatprep.subr.mxu0 0.0
    %459 = vmatpush2.msra.mxu0 0.0
    %460 = vmatprep.subr.mxu0 0.0
    %461 = vmatpush2.msra.mxu0 0.0
    %462 = vmatprep.subr.mxu0 0.0
    %463 = vmatpush2.msra.mxu0 0.0
    %464 = vmatprep.subr.mxu0 0.0
    %465 = vmatpush2.msra.mxu0 0.0
    %466 = vmatprep.subr.mxu0 0.0
    %467 = vmatpush2.msra.mxu0 0.0
    %468 = vmatprep.mubr.f32.mxu0 0.0
    %469 = vmatmul.mubr.f32.gmra.mxu0 %v402
    %v470 = vpop.f32.mrf.mxu0
    %v471 = vadd.f32 %v208, %v470
    %v472 = vpop.f32.mrf.mxu0
    %473 = vdwg.mxu0
    %s474 = scalar_lea.vmem [#allocation10], 2
    %475 = vst [vmem:[%s474] sm:$0x3] %v471
    %s476 = scalar_lea.vmem [#allocation4], 4
    %v477 = vld [vmem:[%s476] sm:$0x3]
    %479 = vrot.lane.b32.xlu0 %v396, 32
    %v480 = vpop.permute.xlu0 %479
    %v481 = vsel %vm88, %v480, 0
    %483 = vmatprep.subr.mxu0 0.0
    %484 = vmatpush1.msra.mxu0 0.0
    %485 = vmatprep.subr.mxu0 0.0
    %486 = vmatpush1.msra.mxu0 0.0
    %487 = vmatprep.subr.mxu0 0.0
    %488 = vmatpush1.msra.mxu0 0.0
    %489 = vmatprep.subr.mxu0 0.0
    %490 = vmatpush1.msra.mxu0 0.0
    %491 = vmatprep.subr.mxu0 0.0
    %492 = vmatpush1.msra.mxu0 0.0
    %493 = vmatprep.subr.mxu0 0.0
    %494 = vmatpush1.msra.mxu0 0.0
    %495 = vmatprep.subr.mxu0 0.0
    %496 = vmatpush1.msra.mxu0 0.0
    %497 = vmatprep.subr.mxu0 0.0
    %498 = vmatpush1.msra.mxu0 0.0
    %499 = vmatprep.subr.mxu0 0.0
    %500 = vmatpush1.msra.mxu0 0.0
    %501 = vmatprep.subr.mxu0 0.0
    %502 = vmatpush1.msra.mxu0 0.0
    %503 = vmatprep.subr.mxu0 0.0
    %504 = vmatpush1.msra.mxu0 0.0
    %505 = vmatprep.subr.mxu0 0.0
    %506 = vmatpush1.msra.mxu0 0.0
    %507 = vmatprep.subr.mxu0 0.0
    %508 = vmatpush1.msra.mxu0 %v77
    %509 = vmatprep.subr.mxu0 0.0
    %510 = vmatpush1.msra.mxu0 %v76
    %511 = vmatprep.subr.mxu0 0.0
    %512 = vmatpush1.msra.mxu0 %v75
    %513 = vmatprep.subr.mxu0 0.0
    %514 = vmatpush1.msra.mxu0 %v74
    %515 = vmatprep.subr.mxu0 0.0
    %516 = vmatpush2.msra.mxu0 0.0
    %517 = vmatprep.subr.mxu0 0.0
    %518 = vmatpush2.msra.mxu0 0.0
    %519 = vmatprep.subr.mxu0 0.0
    %520 = vmatpush2.msra.mxu0 0.0
    %521 = vmatprep.subr.mxu0 0.0
    %522 = vmatpush2.msra.mxu0 0.0
    %523 = vmatprep.subr.mxu0 0.0
    %524 = vmatpush2.msra.mxu0 0.0
    %525 = vmatprep.subr.mxu0 0.0
    %526 = vmatpush2.msra.mxu0 0.0
    %527 = vmatprep.subr.mxu0 0.0
    %528 = vmatpush2.msra.mxu0 0.0
    %529 = vmatprep.subr.mxu0 0.0
    %530 = vmatpush2.msra.mxu0 0.0
    %531 = vmatprep.subr.mxu0 0.0
    %532 = vmatpush2.msra.mxu0 0.0
    %533 = vmatprep.subr.mxu0 0.0
    %534 = vmatpush2.msra.mxu0 0.0
    %535 = vmatprep.subr.mxu0 0.0
    %536 = vmatpush2.msra.mxu0 0.0
    %537 = vmatprep.subr.mxu0 0.0
    %538 = vmatpush2.msra.mxu0 0.0
    %539 = vmatprep.subr.mxu0 0.0
    %540 = vmatpush2.msra.mxu0 0.0
    %541 = vmatprep.subr.mxu0 0.0
    %542 = vmatpush2.msra.mxu0 0.0
    %543 = vmatprep.subr.mxu0 0.0
    %544 = vmatpush2.msra.mxu0 0.0
    %545 = vmatprep.subr.mxu0 0.0
    %546 = vmatpush2.msra.mxu0 0.0
    %547 = vmatprep.mubr.f32.mxu0 0.0
    %548 = vmatmul.mubr.f32.gmra.mxu0 %v481
    %v549 = vpop.f32.mrf.mxu0
    %v550 = vadd.f32 0.0, %v549
    %v551 = vpop.f32.mrf.mxu0
    %552 = vdwg.mxu0
    %v553 = vadd.f32 %v477, %v550
    %v554 = vxor.u32 %v553, 2147483648
    %v555 = vmul.f32 %v554, 1.442695
    %v556 = vpow.pop %v555
    %v557 = vadd.f32 %v556, 1.0
    %v558 = vrcp.pop %v557
    %v559 = vmul.f32 1.0, %v558
    %v560 = vtanh.pop %v553
    %v561 = vmul.f32 %v559, %v397
    %563 = vrot.lane.b32.xlu0 %v560, 64
    %v564 = vpop.permute.xlu0 %563
    %v566 = vmul.f32 %v559, %v564
    %568 = vrot.lane.b32.xlu0 %v566, 32
    %v569 = vpop.permute.xlu0 %568
    %v571 = vadd.f32 %v561, %v569
    %v572 = vtanh.pop %v571
    %574 = vrot.lane.b32.xlu0 %v572, 64
    %v575 = vpop.permute.xlu0 %574
    %v577 = vmul.f32 %v559, %v575
    %s578 = sadd.s32 %s79, 2
    %v579 = vstv %s578
    %vm580 = vcmp.gt.s32.totalorder %v78, %v579
    %v581 = vsel %vm580, 1, 0
    %582 = vset.pattern.permute.xlu0 0
    %583 = vperm.xlu0 %582, %v581
    %v584 = vpop.permute.xlu0 %583
    %vm585 = vcmp.eq.s32.totalorder %v584, 1
    %v586 = vsel %vm585, %v577, %v396
    %v587 = vsel %vm585, %v571, %v397
    %v588 = vsel %vm585, %v577, 0.0
    %590 = vrot.lane.b32.xlu0 %v588, 32
    %v591 = vpop.permute.xlu0 %590
    %v592 = vsel %vm88, %v591, 0
    %594 = vmatprep.subr.mxu0 0.0
    %595 = vmatpush1.msra.mxu0 0.0
    %596 = vmatprep.subr.mxu0 0.0
    %597 = vmatpush1.msra.mxu0 0.0
    %598 = vmatprep.subr.mxu0 0.0
    %599 = vmatpush1.msra.mxu0 0.0
    %600 = vmatprep.subr.mxu0 0.0
    %601 = vmatpush1.msra.mxu0 0.0
    %602 = vmatprep.subr.mxu0 0.0
    %603 = vmatpush1.msra.mxu0 0.0
    %604 = vmatprep.subr.mxu0 0.0
    %605 = vmatpush1.msra.mxu0 0.0
    %606 = vmatprep.subr.mxu0 0.0
    %607 = vmatpush1.msra.mxu0 0.0
    %608 = vmatprep.subr.mxu0 0.0
    %609 = vmatpush1.msra.mxu0 0.0
    %610 = vmatprep.subr.mxu0 0.0
    %611 = vmatpush1.msra.mxu0 0.0
    %612 = vmatprep.subr.mxu0 0.0
    %613 = vmatpush1.msra.mxu0 0.0
    %614 = vmatprep.subr.mxu0 0.0
    %615 = vmatpush1.msra.mxu0 0.0
    %616 = vmatprep.subr.mxu0 0.0
    %617 = vmatpush1.msra.mxu0 0.0
    %618 = vmatprep.subr.mxu0 0.0
    %619 = vmatpush1.msra.mxu0 %v83
    %620 = vmatprep.subr.mxu0 0.0
    %621 = vmatpush1.msra.mxu0 %v82
    %622 = vmatprep.subr.mxu0 0.0
    %623 = vmatpush1.msra.mxu0 %v81
    %624 = vmatprep.subr.mxu0 0.0
    %625 = vmatpush1.msra.mxu0 %v80
    %626 = vmatprep.subr.mxu0 0.0
    %627 = vmatpush2.msra.mxu0 0.0
    %628 = vmatprep.subr.mxu0 0.0
    %629 = vmatpush2.msra.mxu0 0.0
    %630 = vmatprep.subr.mxu0 0.0
    %631 = vmatpush2.msra.mxu0 0.0
    %632 = vmatprep.subr.mxu0 0.0
    %633 = vmatpush2.msra.mxu0 0.0
    %634 = vmatprep.subr.mxu0 0.0
    %635 = vmatpush2.msra.mxu0 0.0
    %636 = vmatprep.subr.mxu0 0.0
    %637 = vmatpush2.msra.mxu0 0.0
    %638 = vmatprep.subr.mxu0 0.0
    %639 = vmatpush2.msra.mxu0 0.0
    %640 = vmatprep.subr.mxu0 0.0
    %641 = vmatpush2.msra.mxu0 0.0
    %642 = vmatprep.subr.mxu0 0.0
    %643 = vmatpush2.msra.mxu0 0.0
    %644 = vmatprep.subr.mxu0 0.0
    %645 = vmatpush2.msra.mxu0 0.0
    %646 = vmatprep.subr.mxu0 0.0
    %647 = vmatpush2.msra.mxu0 0.0
    %648 = vmatprep.subr.mxu0 0.0
    %649 = vmatpush2.msra.mxu0 0.0
    %650 = vmatprep.subr.mxu0 0.0
    %651 = vmatpush2.msra.mxu0 0.0
    %652 = vmatprep.subr.mxu0 0.0
    %653 = vmatpush2.msra.mxu0 0.0
    %654 = vmatprep.subr.mxu0 0.0
    %655 = vmatpush2.msra.mxu0 0.0
    %656 = vmatprep.subr.mxu0 0.0
    %657 = vmatpush2.msra.mxu0 0.0
    %658 = vmatprep.mubr.f32.mxu0 0.0
    %659 = vmatmul.mubr.f32.gmra.mxu0 %v592
    %v660 = vpop.f32.mrf.mxu0
    %v661 = vadd.f32 %v208, %v660
    %v662 = vpop.f32.mrf.mxu0
    %663 = vdwg.mxu0
    %s664 = scalar_lea.vmem [#allocation10], 4
    %665 = vst [vmem:[%s664] sm:$0x3] %v661
    %s666 = scalar_lea.vmem [#allocation4], 6
    %v667 = vld [vmem:[%s666] sm:$0x3]
    %669 = vrot.lane.b32.xlu0 %v586, 32
    %v670 = vpop.permute.xlu0 %669
    %v671 = vsel %vm88, %v670, 0
    %673 = vmatprep.subr.mxu0 0.0
    %674 = vmatpush1.msra.mxu0 0.0
    %675 = vmatprep.subr.mxu0 0.0
    %676 = vmatpush1.msra.mxu0 0.0
    %677 = vmatprep.subr.mxu0 0.0
    %678 = vmatpush1.msra.mxu0 0.0
    %679 = vmatprep.subr.mxu0 0.0
    %680 = vmatpush1.msra.mxu0 0.0
    %681 = vmatprep.subr.mxu0 0.0
    %682 = vmatpush1.msra.mxu0 0.0
    %683 = vmatprep.subr.mxu0 0.0
    %684 = vmatpush1.msra.mxu0 0.0
    %685 = vmatprep.subr.mxu0 0.0
    %686 = vmatpush1.msra.mxu0 0.0
    %687 = vmatprep.subr.mxu0 0.0
    %688 = vmatpush1.msra.mxu0 0.0
    %689 = vmatprep.subr.mxu0 0.0
    %690 = vmatpush1.msra.mxu0 0.0
    %691 = vmatprep.subr.mxu0 0.0
    %692 = vmatpush1.msra.mxu0 0.0
    %693 = vmatprep.subr.mxu0 0.0
    %694 = vmatpush1.msra.mxu0 0.0
    %695 = vmatprep.subr.mxu0 0.0
    %696 = vmatpush1.msra.mxu0 0.0
    %697 = vmatprep.subr.mxu0 0.0
    %698 = vmatpush1.msra.mxu0 %v77
    %699 = vmatprep.subr.mxu0 0.0
    %700 = vmatpush1.msra.mxu0 %v76
    %701 = vmatprep.subr.mxu0 0.0
    %702 = vmatpush1.msra.mxu0 %v75
    %703 = vmatprep.subr.mxu0 0.0
    %704 = vmatpush1.msra.mxu0 %v74
    %705 = vmatprep.subr.mxu0 0.0
    %706 = vmatpush2.msra.mxu0 0.0
    %707 = vmatprep.subr.mxu0 0.0
    %708 = vmatpush2.msra.mxu0 0.0
    %709 = vmatprep.subr.mxu0 0.0
    %710 = vmatpush2.msra.mxu0 0.0
    %711 = vmatprep.subr.mxu0 0.0
    %712 = vmatpush2.msra.mxu0 0.0
    %713 = vmatprep.subr.mxu0 0.0
    %714 = vmatpush2.msra.mxu0 0.0
    %715 = vmatprep.subr.mxu0 0.0
    %716 = vmatpush2.msra.mxu0 0.0
    %717 = vmatprep.subr.mxu0 0.0
    %718 = vmatpush2.msra.mxu0 0.0
    %719 = vmatprep.subr.mxu0 0.0
    %720 = vmatpush2.msra.mxu0 0.0
    %721 = vmatprep.subr.mxu0 0.0
    %722 = vmatpush2.msra.mxu0 0.0
    %723 = vmatprep.subr.mxu0 0.0
    %724 = vmatpush2.msra.mxu0 0.0
    %725 = vmatprep.subr.mxu0 0.0
    %726 = vmatpush2.msra.mxu0 0.0
    %727 = vmatprep.subr.mxu0 0.0
    %728 = vmatpush2.msra.mxu0 0.0
    %729 = vmatprep.subr.mxu0 0.0
    %730 = vmatpush2.msra.mxu0 0.0
    %731 = vmatprep.subr.mxu0 0.0
    %732 = vmatpush2.msra.mxu0 0.0
    %733 = vmatprep.subr.mxu0 0.0
    %734 = vmatpush2.msra.mxu0 0.0
    %735 = vmatprep.subr.mxu0 0.0
    %736 = vmatpush2.msra.mxu0 0.0
    %737 = vmatprep.mubr.f32.mxu0 0.0
    %738 = vmatmul.mubr.f32.gmra.mxu0 %v671
    %v739 = vpop.f32.mrf.mxu0
    %v740 = vadd.f32 0.0, %v739
    %v741 = vpop.f32.mrf.mxu0
    %742 = vdwg.mxu0
    %v743 = vadd.f32 %v667, %v740
    %v744 = vxor.u32 %v743, 2147483648
    %v745 = vmul.f32 %v744, 1.442695
    %v746 = vpow.pop %v745
    %v747 = vadd.f32 %v746, 1.0
    %v748 = vrcp.pop %v747
    %v749 = vmul.f32 1.0, %v748
    %v750 = vtanh.pop %v743
    %v751 = vmul.f32 %v749, %v587
    %753 = vrot.lane.b32.xlu0 %v750, 64
    %v754 = vpop.permute.xlu0 %753
    %v756 = vmul.f32 %v749, %v754
    %758 = vrot.lane.b32.xlu0 %v756, 32
    %v759 = vpop.permute.xlu0 %758
    %v761 = vadd.f32 %v751, %v759
    %v762 = vtanh.pop %v761
    %764 = vrot.lane.b32.xlu0 %v762, 64
    %v765 = vpop.permute.xlu0 %764
    %v767 = vmul.f32 %v749, %v765
    %s768 = sadd.s32 %s79, 3
    %v769 = vstv %s768
    %vm770 = vcmp.gt.s32.totalorder %v78, %v769
    %v771 = vsel %vm770, 1, 0
    %772 = vset.pattern.permute.xlu0 0
    %773 = vperm.xlu0 %772, %v771
    %v774 = vpop.permute.xlu0 %773
    %vm775 = vcmp.eq.s32.totalorder %v774, 1
    %v776 = vsel %vm775, %v767, %v586
    %v777 = vsel %vm775, %v761, %v587
    %v778 = vsel %vm775, %v767, 0.0
    %780 = vrot.lane.b32.xlu0 %v778, 32
    %v781 = vpop.permute.xlu0 %780
    %v782 = vsel %vm88, %v781, 0
    %784 = vmatprep.subr.mxu0 0.0
    %785 = vmatpush1.msra.mxu0 0.0
    %786 = vmatprep.subr.mxu0 0.0
    %787 = vmatpush1.msra.mxu0 0.0
    %788 = vmatprep.subr.mxu0 0.0
    %789 = vmatpush1.msra.mxu0 0.0
    %790 = vmatprep.subr.mxu0 0.0
    %791 = vmatpush1.msra.mxu0 0.0
    %792 = vmatprep.subr.mxu0 0.0
    %793 = vmatpush1.msra.mxu0 0.0
    %794 = vmatprep.subr.mxu0 0.0
    %795 = vmatpush1.msra.mxu0 0.0
    %796 = vmatprep.subr.mxu0 0.0
    %797 = vmatpush1.msra.mxu0 0.0
    %798 = vmatprep.subr.mxu0 0.0
    %799 = vmatpush1.msra.mxu0 0.0
    %800 = vmatprep.subr.mxu0 0.0
    %801 = vmatpush1.msra.mxu0 0.0
    %802 = vmatprep.subr.mxu0 0.0
    %803 = vmatpush1.msra.mxu0 0.0
    %804 = vmatprep.subr.mxu0 0.0
    %805 = vmatpush1.msra.mxu0 0.0
    %806 = vmatprep.subr.mxu0 0.0
    %807 = vmatpush1.msra.mxu0 0.0
    %808 = vmatprep.subr.mxu0 0.0
    %809 = vmatpush1.msra.mxu0 %v83
    %810 = vmatprep.subr.mxu0 0.0
    %811 = vmatpush1.msra.mxu0 %v82
    %812 = vmatprep.subr.mxu0 0.0
    %813 = vmatpush1.msra.mxu0 %v81
    %814 = vmatprep.subr.mxu0 0.0
    %815 = vmatpush1.msra.mxu0 %v80
    %816 = vmatprep.subr.mxu0 0.0
    %817 = vmatpush2.msra.mxu0 0.0
    %818 = vmatprep.subr.mxu0 0.0
    %819 = vmatpush2.msra.mxu0 0.0
    %820 = vmatprep.subr.mxu0 0.0
    %821 = vmatpush2.msra.mxu0 0.0
    %822 = vmatprep.subr.mxu0 0.0
    %823 = vmatpush2.msra.mxu0 0.0
    %824 = vmatprep.subr.mxu0 0.0
    %825 = vmatpush2.msra.mxu0 0.0
    %826 = vmatprep.subr.mxu0 0.0
    %827 = vmatpush2.msra.mxu0 0.0
    %828 = vmatprep.subr.mxu0 0.0
    %829 = vmatpush2.msra.mxu0 0.0
    %830 = vmatprep.subr.mxu0 0.0
    %831 = vmatpush2.msra.mxu0 0.0
    %832 = vmatprep.subr.mxu0 0.0
    %833 = vmatpush2.msra.mxu0 0.0
    %834 = vmatprep.subr.mxu0 0.0
    %835 = vmatpush2.msra.mxu0 0.0
    %836 = vmatprep.subr.mxu0 0.0
    %837 = vmatpush2.msra.mxu0 0.0
    %838 = vmatprep.subr.mxu0 0.0
    %839 = vmatpush2.msra.mxu0 0.0
    %840 = vmatprep.subr.mxu0 0.0
    %841 = vmatpush2.msra.mxu0 0.0
    %842 = vmatprep.subr.mxu0 0.0
    %843 = vmatpush2.msra.mxu0 0.0
    %844 = vmatprep.subr.mxu0 0.0
    %845 = vmatpush2.msra.mxu0 0.0
    %846 = vmatprep.subr.mxu0 0.0
    %847 = vmatpush2.msra.mxu0 0.0
    %848 = vmatprep.mubr.f32.mxu0 0.0
    %849 = vmatmul.mubr.f32.gmra.mxu0 %v782
    %v850 = vpop.f32.mrf.mxu0
    %v851 = vadd.f32 %v208, %v850
    %v852 = vpop.f32.mrf.mxu0
    %853 = vdwg.mxu0
    %s854 = scalar_lea.vmem [#allocation10], 6
    %855 = vst [vmem:[%s854] sm:$0x3] %v851
    %s856 = scalar_lea.vmem [#allocation4], 8
    %v857 = vld [vmem:[%s856] sm:$0x3]
    %859 = vrot.lane.b32.xlu0 %v776, 32
    %v860 = vpop.permute.xlu0 %859
    %v861 = vsel %vm88, %v860, 0
    %863 = vmatprep.subr.mxu0 0.0
    %864 = vmatpush1.msra.mxu0 0.0
    %865 = vmatprep.subr.mxu0 0.0
    %866 = vmatpush1.msra.mxu0 0.0
    %867 = vmatprep.subr.mxu0 0.0
    %868 = vmatpush1.msra.mxu0 0.0
    %869 = vmatprep.subr.mxu0 0.0
    %870 = vmatpush1.msra.mxu0 0.0
    %871 = vmatprep.subr.mxu0 0.0
    %872 = vmatpush1.msra.mxu0 0.0
    %873 = vmatprep.subr.mxu0 0.0
    %874 = vmatpush1.msra.mxu0 0.0
    %875 = vmatprep.subr.mxu0 0.0
    %876 = vmatpush1.msra.mxu0 0.0
    %877 = vmatprep.subr.mxu0 0.0
    %878 = vmatpush1.msra.mxu0 0.0
    %879 = vmatprep.subr.mxu0 0.0
    %880 = vmatpush1.msra.mxu0 0.0
    %881 = vmatprep.subr.mxu0 0.0
    %882 = vmatpush1.msra.mxu0 0.0
    %883 = vmatprep.subr.mxu0 0.0
    %884 = vmatpush1.msra.mxu0 0.0
    %885 = vmatprep.subr.mxu0 0.0
    %886 = vmatpush1.msra.mxu0 0.0
    %887 = vmatprep.subr.mxu0 0.0
    %888 = vmatpush1.msra.mxu0 %v77
    %889 = vmatprep.subr.mxu0 0.0
    %890 = vmatpush1.msra.mxu0 %v76
    %891 = vmatprep.subr.mxu0 0.0
    %892 = vmatpush1.msra.mxu0 %v75
    %893 = vmatprep.subr.mxu0 0.0
    %894 = vmatpush1.msra.mxu0 %v74
    %895 = vmatprep.subr.mxu0 0.0
    %896 = vmatpush2.msra.mxu0 0.0
    %897 = vmatprep.subr.mxu0 0.0
    %898 = vmatpush2.msra.mxu0 0.0
    %899 = vmatprep.subr.mxu0 0.0
    %900 = vmatpush2.msra.mxu0 0.0
    %901 = vmatprep.subr.mxu0 0.0
    %902 = vmatpush2.msra.mxu0 0.0
    %903 = vmatprep.subr.mxu0 0.0
    %904 = vmatpush2.msra.mxu0 0.0
    %905 = vmatprep.subr.mxu0 0.0
    %906 = vmatpush2.msra.mxu0 0.0
    %907 = vmatprep.subr.mxu0 0.0
    %908 = vmatpush2.msra.mxu0 0.0
    %909 = vmatprep.subr.mxu0 0.0
    %910 = vmatpush2.msra.mxu0 0.0
    %911 = vmatprep.subr.mxu0 0.0
    %912 = vmatpush2.msra.mxu0 0.0
    %913 = vmatprep.subr.mxu0 0.0
    %914 = vmatpush2.msra.mxu0 0.0
    %915 = vmatprep.subr.mxu0 0.0
    %916 = vmatpush2.msra.mxu0 0.0
    %917 = vmatprep.subr.mxu0 0.0
    %918 = vmatpush2.msra.mxu0 0.0
    %919 = vmatprep.subr.mxu0 0.0
    %920 = vmatpush2.msra.mxu0 0.0
    %921 = vmatprep.subr.mxu0 0.0
    %922 = vmatpush2.msra.mxu0 0.0
    %923 = vmatprep.subr.mxu0 0.0
    %924 = vmatpush2.msra.mxu0 0.0
    %925 = vmatprep.subr.mxu0 0.0
    %926 = vmatpush2.msra.mxu0 0.0
    %927 = vmatprep.mubr.f32.mxu0 0.0
    %928 = vmatmul.mubr.f32.gmra.mxu0 %v861
    %v929 = vpop.f32.mrf.mxu0
    %v930 = vadd.f32 0.0, %v929
    %v931 = vpop.f32.mrf.mxu0
    %932 = vdwg.mxu0
    %v933 = vadd.f32 %v857, %v930
    %v934 = vxor.u32 %v933, 2147483648
    %v935 = vmul.f32 %v934, 1.442695
    %v936 = vpow.pop %v935
    %v937 = vadd.f32 %v936, 1.0
    %v938 = vrcp.pop %v937
    %v939 = vmul.f32 1.0, %v938
    %v940 = vtanh.pop %v933
    %v941 = vmul.f32 %v939, %v777
    %943 = vrot.lane.b32.xlu0 %v940, 64
    %v944 = vpop.permute.xlu0 %943
    %v946 = vmul.f32 %v939, %v944
    %948 = vrot.lane.b32.xlu0 %v946, 32
    %v949 = vpop.permute.xlu0 %948
    %v951 = vadd.f32 %v941, %v949
    %v952 = vtanh.pop %v951
    %954 = vrot.lane.b32.xlu0 %v952, 64
    %v955 = vpop.permute.xlu0 %954
    %v957 = vmul.f32 %v939, %v955
    %s958 = sadd.s32 %s79, 4
    %v959 = vstv %s958
    %vm960 = vcmp.gt.s32.totalorder %v78, %v959
    %v961 = vsel %vm960, 1, 0
    %962 = vset.pattern.permute.xlu0 0
    %963 = vperm.xlu0 %962, %v961
    %v964 = vpop.permute.xlu0 %963
    %vm965 = vcmp.eq.s32.totalorder %v964, 1
    %v966 = vsel %vm965, %v957, %v776
    %v967 = vsel %vm965, %v951, %v777
    %v968 = vsel %vm965, %v957, 0.0
    %970 = vrot.lane.b32.xlu0 %v968, 32
    %v971 = vpop.permute.xlu0 %970
    %v972 = vsel %vm88, %v971, 0
    %974 = vmatprep.subr.mxu0 0.0
    %975 = vmatpush1.msra.mxu0 0.0
    %976 = vmatprep.subr.mxu0 0.0
    %977 = vmatpush1.msra.mxu0 0.0
    %978 = vmatprep.subr.mxu0 0.0
    %979 = vmatpush1.msra.mxu0 0.0
    %980 = vmatprep.subr.mxu0 0.0
    %981 = vmatpush1.msra.mxu0 0.0
    %982 = vmatprep.subr.mxu0 0.0
    %983 = vmatpush1.msra.mxu0 0.0
    %984 = vmatprep.subr.mxu0 0.0
    %985 = vmatpush1.msra.mxu0 0.0
    %986 = vmatprep.subr.mxu0 0.0
    %987 = vmatpush1.msra.mxu0 0.0
    %988 = vmatprep.subr.mxu0 0.0
    %989 = vmatpush1.msra.mxu0 0.0
    %990 = vmatprep.subr.mxu0 0.0
    %991 = vmatpush1.msra.mxu0 0.0
    %992 = vmatprep.subr.mxu0 0.0
    %993 = vmatpush1.msra.mxu0 0.0
    %994 = vmatprep.subr.mxu0 0.0
    %995 = vmatpush1.msra.mxu0 0.0
    %996 = vmatprep.subr.mxu0 0.0
    %997 = vmatpush1.msra.mxu0 0.0
    %998 = vmatprep.subr.mxu0 0.0
    %999 = vmatpush1.msra.mxu0 %v83
    %1000 = vmatprep.subr.mxu0 0.0
    %1001 = vmatpush1.msra.mxu0 %v82
    %1002 = vmatprep.subr.mxu0 0.0
    %1003 = vmatpush1.msra.mxu0 %v81
    %1004 = vmatprep.subr.mxu0 0.0
    %1005 = vmatpush1.msra.mxu0 %v80
    %1006 = vmatprep.subr.mxu0 0.0
    %1007 = vmatpush2.msra.mxu0 0.0
    %1008 = vmatprep.subr.mxu0 0.0
    %1009 = vmatpush2.msra.mxu0 0.0
    %1010 = vmatprep.subr.mxu0 0.0
    %1011 = vmatpush2.msra.mxu0 0.0
    %1012 = vmatprep.subr.mxu0 0.0
    %1013 = vmatpush2.msra.mxu0 0.0
    %1014 = vmatprep.subr.mxu0 0.0
    %1015 = vmatpush2.msra.mxu0 0.0
    %1016 = vmatprep.subr.mxu0 0.0
    %1017 = vmatpush2.msra.mxu0 0.0
    %1018 = vmatprep.subr.mxu0 0.0
    %1019 = vmatpush2.msra.mxu0 0.0
    %1020 = vmatprep.subr.mxu0 0.0
    %1021 = vmatpush2.msra.mxu0 0.0
    %1022 = vmatprep.subr.mxu0 0.0
    %1023 = vmatpush2.msra.mxu0 0.0
    %1024 = vmatprep.subr.mxu0 0.0
    %1025 = vmatpush2.msra.mxu0 0.0
    %1026 = vmatprep.subr.mxu0 0.0
    %1027 = vmatpush2.msra.mxu0 0.0
    %1028 = vmatprep.subr.mxu0 0.0
    %1029 = vmatpush2.msra.mxu0 0.0
    %1030 = vmatprep.subr.mxu0 0.0
    %1031 = vmatpush2.msra.mxu0 0.0
    %1032 = vmatprep.subr.mxu0 0.0
    %1033 = vmatpush2.msra.mxu0 0.0
    %1034 = vmatprep.subr.mxu0 0.0
    %1035 = vmatpush2.msra.mxu0 0.0
    %1036 = vmatprep.subr.mxu0 0.0
    %1037 = vmatpush2.msra.mxu0 0.0
    %1038 = vmatprep.mubr.f32.mxu0 0.0
    %1039 = vmatmul.mubr.f32.gmra.mxu0 %v972
    %v1040 = vpop.f32.mrf.mxu0
    %v1041 = vadd.f32 %v208, %v1040
    %v1042 = vpop.f32.mrf.mxu0
    %1043 = vdwg.mxu0
    %s1044 = scalar_lea.vmem [#allocation10], 8
    %1045 = vst [vmem:[%s1044] sm:$0x3] %v1041
    %s1046 = scalar_lea.vmem [#allocation4], 10
    %v1047 = vld [vmem:[%s1046] sm:$0x3]
    %1049 = vrot.lane.b32.xlu0 %v966, 32
    %v1050 = vpop.permute.xlu0 %1049
    %v1051 = vsel %vm88, %v1050, 0
    %1053 = vmatprep.subr.mxu0 0.0
    %1054 = vmatpush1.msra.mxu0 0.0
    %1055 = vmatprep.subr.mxu0 0.0
    %1056 = vmatpush1.msra.mxu0 0.0
    %1057 = vmatprep.subr.mxu0 0.0
    %1058 = vmatpush1.msra.mxu0 0.0
    %1059 = vmatprep.subr.mxu0 0.0
    %1060 = vmatpush1.msra.mxu0 0.0
    %1061 = vmatprep.subr.mxu0 0.0
    %1062 = vmatpush1.msra.mxu0 0.0
    %1063 = vmatprep.subr.mxu0 0.0
    %1064 = vmatpush1.msra.mxu0 0.0
    %1065 = vmatprep.subr.mxu0 0.0
    %1066 = vmatpush1.msra.mxu0 0.0
    %1067 = vmatprep.subr.mxu0 0.0
    %1068 = vmatpush1.msra.mxu0 0.0
    %1069 = vmatprep.subr.mxu0 0.0
    %1070 = vmatpush1.msra.mxu0 0.0
    %1071 = vmatprep.subr.mxu0 0.0
    %1072 = vmatpush1.msra.mxu0 0.0
    %1073 = vmatprep.subr.mxu0 0.0
    %1074 = vmatpush1.msra.mxu0 0.0
    %1075 = vmatprep.subr.mxu0 0.0
    %1076 = vmatpush1.msra.mxu0 0.0
    %1077 = vmatprep.subr.mxu0 0.0
    %1078 = vmatpush1.msra.mxu0 %v77
    %1079 = vmatprep.subr.mxu0 0.0
    %1080 = vmatpush1.msra.mxu0 %v76
    %1081 = vmatprep.subr.mxu0 0.0
    %1082 = vmatpush1.msra.mxu0 %v75
    %1083 = vmatprep.subr.mxu0 0.0
    %1084 = vmatpush1.msra.mxu0 %v74
    %1085 = vmatprep.subr.mxu0 0.0
    %1086 = vmatpush2.msra.mxu0 0.0
    %1087 = vmatprep.subr.mxu0 0.0
    %1088 = vmatpush2.msra.mxu0 0.0
    %1089 = vmatprep.subr.mxu0 0.0
    %1090 = vmatpush2.msra.mxu0 0.0
    %1091 = vmatprep.subr.mxu0 0.0
    %1092 = vmatpush2.msra.mxu0 0.0
    %1093 = vmatprep.subr.mxu0 0.0
    %1094 = vmatpush2.msra.mxu0 0.0
    %1095 = vmatprep.subr.mxu0 0.0
    %1096 = vmatpush2.msra.mxu0 0.0
    %1097 = vmatprep.subr.mxu0 0.0
    %1098 = vmatpush2.msra.mxu0 0.0
    %1099 = vmatprep.subr.mxu0 0.0
    %1100 = vmatpush2.msra.mxu0 0.0
    %1101 = vmatprep.subr.mxu0 0.0
    %1102 = vmatpush2.msra.mxu0 0.0
    %1103 = vmatprep.subr.mxu0 0.0
    %1104 = vmatpush2.msra.mxu0 0.0
    %1105 = vmatprep.subr.mxu0 0.0
    %1106 = vmatpush2.msra.mxu0 0.0
    %1107 = vmatprep.subr.mxu0 0.0
    %1108 = vmatpush2.msra.mxu0 0.0
    %1109 = vmatprep.subr.mxu0 0.0
    %1110 = vmatpush2.msra.mxu0 0.0
    %1111 = vmatprep.subr.mxu0 0.0
    %1112 = vmatpush2.msra.mxu0 0.0
    %1113 = vmatprep.subr.mxu0 0.0
    %1114 = vmatpush2.msra.mxu0 0.0
    %1115 = vmatprep.subr.mxu0 0.0
    %1116 = vmatpush2.msra.mxu0 0.0
    %1117 = vmatprep.mubr.f32.mxu0 0.0
    %1118 = vmatmul.mubr.f32.gmra.mxu0 %v1051
    %v1119 = vpop.f32.mrf.mxu0
    %v1120 = vadd.f32 0.0, %v1119
    %v1121 = vpop.f32.mrf.mxu0
    %1122 = vdwg.mxu0
    %v1123 = vadd.f32 %v1047, %v1120
    %v1124 = vxor.u32 %v1123, 2147483648
    %v1125 = vmul.f32 %v1124, 1.442695
    %v1126 = vpow.pop %v1125
    %v1127 = vadd.f32 %v1126, 1.0
    %v1128 = vrcp.pop %v1127
    %v1129 = vmul.f32 1.0, %v1128
    %v1130 = vtanh.pop %v1123
    %v1131 = vmul.f32 %v1129, %v967
    %1133 = vrot.lane.b32.xlu0 %v1130, 64
    %v1134 = vpop.permute.xlu0 %1133
    %v1136 = vmul.f32 %v1129, %v1134
    %1138 = vrot.lane.b32.xlu0 %v1136, 32
    %v1139 = vpop.permute.xlu0 %1138
    %v1141 = vadd.f32 %v1131, %v1139
    %v1142 = vtanh.pop %v1141
    %1144 = vrot.lane.b32.xlu0 %v1142, 64
    %v1145 = vpop.permute.xlu0 %1144
    %v1147 = vmul.f32 %v1129, %v1145
    %s1148 = sadd.s32 %s79, 5
    %v1149 = vstv %s1148
    %vm1150 = vcmp.gt.s32.totalorder %v78, %v1149
    %v1151 = vsel %vm1150, 1, 0
    %1152 = vset.pattern.permute.xlu0 0
    %1153 = vperm.xlu0 %1152, %v1151
    %v1154 = vpop.permute.xlu0 %1153
    %vm1155 = vcmp.eq.s32.totalorder %v1154, 1
    %v1156 = vsel %vm1155, %v1147, %v966
    %v1157 = vsel %vm1155, %v1141, %v967
    %v1158 = vsel %vm1155, %v1147, 0.0
    %1160 = vrot.lane.b32.xlu0 %v1158, 32
    %v1161 = vpop.permute.xlu0 %1160
    %v1162 = vsel %vm88, %v1161, 0
    %1164 = vmatprep.subr.mxu0 0.0
    %1165 = vmatpush1.msra.mxu0 0.0
    %1166 = vmatprep.subr.mxu0 0.0
    %1167 = vmatpush1.msra.mxu0 0.0
    %1168 = vmatprep.subr.mxu0 0.0
    %1169 = vmatpush1.msra.mxu0 0.0
    %1170 = vmatprep.subr.mxu0 0.0
    %1171 = vmatpush1.msra.mxu0 0.0
    %1172 = vmatprep.subr.mxu0 0.0
    %1173 = vmatpush1.msra.mxu0 0.0
    %1174 = vmatprep.subr.mxu0 0.0
    %1175 = vmatpush1.msra.mxu0 0.0
    %1176 = vmatprep.subr.mxu0 0.0
    %1177 = vmatpush1.msra.mxu0 0.0
    %1178 = vmatprep.subr.mxu0 0.0
    %1179 = vmatpush1.msra.mxu0 0.0
    %1180 = vmatprep.subr.mxu0 0.0
    %1181 = vmatpush1.msra.mxu0 0.0
    %1182 = vmatprep.subr.mxu0 0.0
    %1183 = vmatpush1.msra.mxu0 0.0
    %1184 = vmatprep.subr.mxu0 0.0
    %1185 = vmatpush1.msra.mxu0 0.0
    %1186 = vmatprep.subr.mxu0 0.0
    %1187 = vmatpush1.msra.mxu0 0.0
    %1188 = vmatprep.subr.mxu0 0.0
    %1189 = vmatpush1.msra.mxu0 %v83
    %1190 = vmatprep.subr.mxu0 0.0
    %1191 = vmatpush1.msra.mxu0 %v82
    %1192 = vmatprep.subr.mxu0 0.0
    %1193 = vmatpush1.msra.mxu0 %v81
    %1194 = vmatprep.subr.mxu0 0.0
    %1195 = vmatpush1.msra.mxu0 %v80
    %1196 = vmatprep.subr.mxu0 0.0
    %1197 = vmatpush2.msra.mxu0 0.0
    %1198 = vmatprep.subr.mxu0 0.0
    %1199 = vmatpush2.msra.mxu0 0.0
    %1200 = vmatprep.subr.mxu0 0.0
    %1201 = vmatpush2.msra.mxu0 0.0
    %1202 = vmatprep.subr.mxu0 0.0
    %1203 = vmatpush2.msra.mxu0 0.0
    %1204 = vmatprep.subr.mxu0 0.0
    %1205 = vmatpush2.msra.mxu0 0.0
    %1206 = vmatprep.subr.mxu0 0.0
    %1207 = vmatpush2.msra.mxu0 0.0
    %1208 = vmatprep.subr.mxu0 0.0
    %1209 = vmatpush2.msra.mxu0 0.0
    %1210 = vmatprep.subr.mxu0 0.0
    %1211 = vmatpush2.msra.mxu0 0.0
    %1212 = vmatprep.subr.mxu0 0.0
    %1213 = vmatpush2.msra.mxu0 0.0
    %1214 = vmatprep.subr.mxu0 0.0
    %1215 = vmatpush2.msra.mxu0 0.0
    %1216 = vmatprep.subr.mxu0 0.0
    %1217 = vmatpush2.msra.mxu0 0.0
    %1218 = vmatprep.subr.mxu0 0.0
    %1219 = vmatpush2.msra.mxu0 0.0
    %1220 = vmatprep.subr.mxu0 0.0
    %1221 = vmatpush2.msra.mxu0 0.0
    %1222 = vmatprep.subr.mxu0 0.0
    %1223 = vmatpush2.msra.mxu0 0.0
    %1224 = vmatprep.subr.mxu0 0.0
    %1225 = vmatpush2.msra.mxu0 0.0
    %1226 = vmatprep.subr.mxu0 0.0
    %1227 = vmatpush2.msra.mxu0 0.0
    %1228 = vmatprep.mubr.f32.mxu0 0.0
    %1229 = vmatmul.mubr.f32.gmra.mxu0 %v1162
    %v1230 = vpop.f32.mrf.mxu0
    %v1231 = vadd.f32 %v208, %v1230
    %v1232 = vpop.f32.mrf.mxu0
    %1233 = vdwg.mxu0
    %s1234 = scalar_lea.vmem [#allocation10], 10
    %1235 = vst [vmem:[%s1234] sm:$0x3] %v1231
    %s1236 = scalar_lea.vmem [#allocation4], 12
    %v1237 = vld [vmem:[%s1236] sm:$0x3]
    %1239 = vrot.lane.b32.xlu0 %v1156, 32
    %v1240 = vpop.permute.xlu0 %1239
    %v1241 = vsel %vm88, %v1240, 0
    %1243 = vmatprep.subr.mxu0 0.0
    %1244 = vmatpush1.msra.mxu0 0.0
    %1245 = vmatprep.subr.mxu0 0.0
    %1246 = vmatpush1.msra.mxu0 0.0
    %1247 = vmatprep.subr.mxu0 0.0
    %1248 = vmatpush1.msra.mxu0 0.0
    %1249 = vmatprep.subr.mxu0 0.0
    %1250 = vmatpush1.msra.mxu0 0.0
    %1251 = vmatprep.subr.mxu0 0.0
    %1252 = vmatpush1.msra.mxu0 0.0
    %1253 = vmatprep.subr.mxu0 0.0
    %1254 = vmatpush1.msra.mxu0 0.0
    %1255 = vmatprep.subr.mxu0 0.0
    %1256 = vmatpush1.msra.mxu0 0.0
    %1257 = vmatprep.subr.mxu0 0.0
    %1258 = vmatpush1.msra.mxu0 0.0
    %1259 = vmatprep.subr.mxu0 0.0
    %1260 = vmatpush1.msra.mxu0 0.0
    %1261 = vmatprep.subr.mxu0 0.0
    %1262 = vmatpush1.msra.mxu0 0.0
    %1263 = vmatprep.subr.mxu0 0.0
    %1264 = vmatpush1.msra.mxu0 0.0
    %1265 = vmatprep.subr.mxu0 0.0
    %1266 = vmatpush1.msra.mxu0 0.0
    %1267 = vmatprep.subr.mxu0 0.0
    %1268 = vmatpush1.msra.mxu0 %v77
    %1269 = vmatprep.subr.mxu0 0.0
    %1270 = vmatpush1.msra.mxu0 %v76
    %1271 = vmatprep.subr.mxu0 0.0
    %1272 = vmatpush1.msra.mxu0 %v75
    %1273 = vmatprep.subr.mxu0 0.0
    %1274 = vmatpush1.msra.mxu0 %v74
    %1275 = vmatprep.subr.mxu0 0.0
    %1276 = vmatpush2.msra.mxu0 0.0
    %1277 = vmatprep.subr.mxu0 0.0
    %1278 = vmatpush2.msra.mxu0 0.0
    %1279 = vmatprep.subr.mxu0 0.0
    %1280 = vmatpush2.msra.mxu0 0.0
    %1281 = vmatprep.subr.mxu0 0.0
    %1282 = vmatpush2.msra.mxu0 0.0
    %1283 = vmatprep.subr.mxu0 0.0
    %1284 = vmatpush2.msra.mxu0 0.0
    %1285 = vmatprep.subr.mxu0 0.0
    %1286 = vmatpush2.msra.mxu0 0.0
    %1287 = vmatprep.subr.mxu0 0.0
    %1288 = vmatpush2.msra.mxu0 0.0
    %1289 = vmatprep.subr.mxu0 0.0
    %1290 = vmatpush2.msra.mxu0 0.0
    %1291 = vmatprep.subr.mxu0 0.0
    %1292 = vmatpush2.msra.mxu0 0.0
    %1293 = vmatprep.subr.mxu0 0.0
    %1294 = vmatpush2.msra.mxu0 0.0
    %1295 = vmatprep.subr.mxu0 0.0
    %1296 = vmatpush2.msra.mxu0 0.0
    %1297 = vmatprep.subr.mxu0 0.0
    %1298 = vmatpush2.msra.mxu0 0.0
    %1299 = vmatprep.subr.mxu0 0.0
    %1300 = vmatpush2.msra.mxu0 0.0
    %1301 = vmatprep.subr.mxu0 0.0
    %1302 = vmatpush2.msra.mxu0 0.0
    %1303 = vmatprep.subr.mxu0 0.0
    %1304 = vmatpush2.msra.mxu0 0.0
    %1305 = vmatprep.subr.mxu0 0.0
    %1306 = vmatpush2.msra.mxu0 0.0
    %1307 = vmatprep.mubr.f32.mxu0 0.0
    %1308 = vmatmul.mubr.f32.gmra.mxu0 %v1241
    %v1309 = vpop.f32.mrf.mxu0
    %v1310 = vadd.f32 0.0, %v1309
    %v1311 = vpop.f32.mrf.mxu0
    %1312 = vdwg.mxu0
    %v1313 = vadd.f32 %v1237, %v1310
    %v1314 = vxor.u32 %v1313, 2147483648
    %v1315 = vmul.f32 %v1314, 1.442695
    %v1316 = vpow.pop %v1315
    %v1317 = vadd.f32 %v1316, 1.0
    %v1318 = vrcp.pop %v1317
    %v1319 = vmul.f32 1.0, %v1318
    %v1320 = vtanh.pop %v1313
    %v1321 = vmul.f32 %v1319, %v1157
    %1323 = vrot.lane.b32.xlu0 %v1320, 64
    %v1324 = vpop.permute.xlu0 %1323
    %v1326 = vmul.f32 %v1319, %v1324
    %1328 = vrot.lane.b32.xlu0 %v1326, 32
    %v1329 = vpop.permute.xlu0 %1328
    %v1331 = vadd.f32 %v1321, %v1329
    %v1332 = vtanh.pop %v1331
    %1334 = vrot.lane.b32.xlu0 %v1332, 64
    %v1335 = vpop.permute.xlu0 %1334
    %v1337 = vmul.f32 %v1319, %v1335
    %s1338 = sadd.s32 %s79, 6
    %v1339 = vstv %s1338
    %vm1340 = vcmp.gt.s32.totalorder %v78, %v1339
    %v1341 = vsel %vm1340, 1, 0
    %1342 = vset.pattern.permute.xlu0 0
    %1343 = vperm.xlu0 %1342, %v1341
    %v1344 = vpop.permute.xlu0 %1343
    %vm1345 = vcmp.eq.s32.totalorder %v1344, 1
    %v1346 = vsel %vm1345, %v1337, %v1156
    %v1347 = vsel %vm1345, %v1331, %v1157
    %v1348 = vsel %vm1345, %v1337, 0.0
    %1350 = vrot.lane.b32.xlu0 %v1348, 32
    %v1351 = vpop.permute.xlu0 %1350
    %v1352 = vsel %vm88, %v1351, 0
    %1354 = vmatprep.subr.mxu0 0.0
    %1355 = vmatpush1.msra.mxu0 0.0
    %1356 = vmatprep.subr.mxu0 0.0
    %1357 = vmatpush1.msra.mxu0 0.0
    %1358 = vmatprep.subr.mxu0 0.0
    %1359 = vmatpush1.msra.mxu0 0.0
    %1360 = vmatprep.subr.mxu0 0.0
    %1361 = vmatpush1.msra.mxu0 0.0
    %1362 = vmatprep.subr.mxu0 0.0
    %1363 = vmatpush1.msra.mxu0 0.0
    %1364 = vmatprep.subr.mxu0 0.0
    %1365 = vmatpush1.msra.mxu0 0.0
    %1366 = vmatprep.subr.mxu0 0.0
    %1367 = vmatpush1.msra.mxu0 0.0
    %1368 = vmatprep.subr.mxu0 0.0
    %1369 = vmatpush1.msra.mxu0 0.0
    %1370 = vmatprep.subr.mxu0 0.0
    %1371 = vmatpush1.msra.mxu0 0.0
    %1372 = vmatprep.subr.mxu0 0.0
    %1373 = vmatpush1.msra.mxu0 0.0
    %1374 = vmatprep.subr.mxu0 0.0
    %1375 = vmatpush1.msra.mxu0 0.0
    %1376 = vmatprep.subr.mxu0 0.0
    %1377 = vmatpush1.msra.mxu0 0.0
    %1378 = vmatprep.subr.mxu0 0.0
    %1379 = vmatpush1.msra.mxu0 %v83
    %1380 = vmatprep.subr.mxu0 0.0
    %1381 = vmatpush1.msra.mxu0 %v82
    %1382 = vmatprep.subr.mxu0 0.0
    %1383 = vmatpush1.msra.mxu0 %v81
    %1384 = vmatprep.subr.mxu0 0.0
    %1385 = vmatpush1.msra.mxu0 %v80
    %1386 = vmatprep.subr.mxu0 0.0
    %1387 = vmatpush2.msra.mxu0 0.0
    %1388 = vmatprep.subr.mxu0 0.0
    %1389 = vmatpush2.msra.mxu0 0.0
    %1390 = vmatprep.subr.mxu0 0.0
    %1391 = vmatpush2.msra.mxu0 0.0
    %1392 = vmatprep.subr.mxu0 0.0
    %1393 = vmatpush2.msra.mxu0 0.0
    %1394 = vmatprep.subr.mxu0 0.0
    %1395 = vmatpush2.msra.mxu0 0.0
    %1396 = vmatprep.subr.mxu0 0.0
    %1397 = vmatpush2.msra.mxu0 0.0
    %1398 = vmatprep.subr.mxu0 0.0
    %1399 = vmatpush2.msra.mxu0 0.0
    %1400 = vmatprep.subr.mxu0 0.0
    %1401 = vmatpush2.msra.mxu0 0.0
    %1402 = vmatprep.subr.mxu0 0.0
    %1403 = vmatpush2.msra.mxu0 0.0
    %1404 = vmatprep.subr.mxu0 0.0
    %1405 = vmatpush2.msra.mxu0 0.0
    %1406 = vmatprep.subr.mxu0 0.0
    %1407 = vmatpush2.msra.mxu0 0.0
    %1408 = vmatprep.subr.mxu0 0.0
    %1409 = vmatpush2.msra.mxu0 0.0
    %1410 = vmatprep.subr.mxu0 0.0
    %1411 = vmatpush2.msra.mxu0 0.0
    %1412 = vmatprep.subr.mxu0 0.0
    %1413 = vmatpush2.msra.mxu0 0.0
    %1414 = vmatprep.subr.mxu0 0.0
    %1415 = vmatpush2.msra.mxu0 0.0
    %1416 = vmatprep.subr.mxu0 0.0
    %1417 = vmatpush2.msra.mxu0 0.0
    %1418 = vmatprep.mubr.f32.mxu0 0.0
    %1419 = vmatmul.mubr.f32.gmra.mxu0 %v1352
    %v1420 = vpop.f32.mrf.mxu0
    %v1421 = vadd.f32 %v208, %v1420
    %v1422 = vpop.f32.mrf.mxu0
    %1423 = vdwg.mxu0
    %s1424 = scalar_lea.vmem [#allocation10], 12
    %1425 = vst [vmem:[%s1424] sm:$0x3] %v1421
    %s1426 = scalar_lea.vmem [#allocation4], 14
    %v1427 = vld [vmem:[%s1426] sm:$0x3]
    %1429 = vrot.lane.b32.xlu0 %v1346, 32
    %v1430 = vpop.permute.xlu0 %1429
    %v1431 = vsel %vm88, %v1430, 0
    %1433 = vmatprep.subr.mxu0 0.0
    %1434 = vmatpush1.msra.mxu0 0.0
    %1435 = vmatprep.subr.mxu0 0.0
    %1436 = vmatpush1.msra.mxu0 0.0
    %1437 = vmatprep.subr.mxu0 0.0
    %1438 = vmatpush1.msra.mxu0 0.0
    %1439 = vmatprep.subr.mxu0 0.0
    %1440 = vmatpush1.msra.mxu0 0.0
    %1441 = vmatprep.subr.mxu0 0.0
    %1442 = vmatpush1.msra.mxu0 0.0
    %1443 = vmatprep.subr.mxu0 0.0
    %1444 = vmatpush1.msra.mxu0 0.0
    %1445 = vmatprep.subr.mxu0 0.0
    %1446 = vmatpush1.msra.mxu0 0.0
    %1447 = vmatprep.subr.mxu0 0.0
    %1448 = vmatpush1.msra.mxu0 0.0
    %1449 = vmatprep.subr.mxu0 0.0
    %1450 = vmatpush1.msra.mxu0 0.0
    %1451 = vmatprep.subr.mxu0 0.0
    %1452 = vmatpush1.msra.mxu0 0.0
    %1453 = vmatprep.subr.mxu0 0.0
    %1454 = vmatpush1.msra.mxu0 0.0
    %1455 = vmatprep.subr.mxu0 0.0
    %1456 = vmatpush1.msra.mxu0 0.0
    %1457 = vmatprep.subr.mxu0 0.0
    %1458 = vmatpush1.msra.mxu0 %v77
    %1459 = vmatprep.subr.mxu0 0.0
    %1460 = vmatpush1.msra.mxu0 %v76
    %1461 = vmatprep.subr.mxu0 0.0
    %1462 = vmatpush1.msra.mxu0 %v75
    %1463 = vmatprep.subr.mxu0 0.0
    %1464 = vmatpush1.msra.mxu0 %v74
    %1465 = vmatprep.subr.mxu0 0.0
    %1466 = vmatpush2.msra.mxu0 0.0
    %1467 = vmatprep.subr.mxu0 0.0
    %1468 = vmatpush2.msra.mxu0 0.0
    %1469 = vmatprep.subr.mxu0 0.0
    %1470 = vmatpush2.msra.mxu0 0.0
    %1471 = vmatprep.subr.mxu0 0.0
    %1472 = vmatpush2.msra.mxu0 0.0
    %1473 = vmatprep.subr.mxu0 0.0
    %1474 = vmatpush2.msra.mxu0 0.0
    %1475 = vmatprep.subr.mxu0 0.0
    %1476 = vmatpush2.msra.mxu0 0.0
    %1477 = vmatprep.subr.mxu0 0.0
    %1478 = vmatpush2.msra.mxu0 0.0
    %1479 = vmatprep.subr.mxu0 0.0
    %1480 = vmatpush2.msra.mxu0 0.0
    %1481 = vmatprep.subr.mxu0 0.0
    %1482 = vmatpush2.msra.mxu0 0.0
    %1483 = vmatprep.subr.mxu0 0.0
    %1484 = vmatpush2.msra.mxu0 0.0
    %1485 = vmatprep.subr.mxu0 0.0
    %1486 = vmatpush2.msra.mxu0 0.0
    %1487 = vmatprep.subr.mxu0 0.0
    %1488 = vmatpush2.msra.mxu0 0.0
    %1489 = vmatprep.subr.mxu0 0.0
    %1490 = vmatpush2.msra.mxu0 0.0
    %1491 = vmatprep.subr.mxu0 0.0
    %1492 = vmatpush2.msra.mxu0 0.0
    %1493 = vmatprep.subr.mxu0 0.0
    %1494 = vmatpush2.msra.mxu0 0.0
    %1495 = vmatprep.subr.mxu0 0.0
    %1496 = vmatpush2.msra.mxu0 0.0
    %1497 = vmatprep.mubr.f32.mxu0 0.0
    %1498 = vmatmul.mubr.f32.gmra.mxu0 %v1431
    %v1499 = vpop.f32.mrf.mxu0
    %v1500 = vadd.f32 0.0, %v1499
    %v1501 = vpop.f32.mrf.mxu0
    %1502 = vdwg.mxu0
    %v1503 = vadd.f32 %v1427, %v1500
    %v1504 = vxor.u32 %v1503, 2147483648
    %v1505 = vmul.f32 %v1504, 1.442695
    %v1506 = vpow.pop %v1505
    %v1507 = vadd.f32 %v1506, 1.0
    %v1508 = vrcp.pop %v1507
    %v1509 = vmul.f32 1.0, %v1508
    %v1510 = vtanh.pop %v1503
    %v1511 = vmul.f32 %v1509, %v1347
    %1513 = vrot.lane.b32.xlu0 %v1510, 64
    %v1514 = vpop.permute.xlu0 %1513
    %v1516 = vmul.f32 %v1509, %v1514
    %1518 = vrot.lane.b32.xlu0 %v1516, 32
    %v1519 = vpop.permute.xlu0 %1518
    %v1521 = vadd.f32 %v1511, %v1519
    %v1522 = vtanh.pop %v1521
    %1524 = vrot.lane.b32.xlu0 %v1522, 64
    %v1525 = vpop.permute.xlu0 %1524
    %v1527 = vmul.f32 %v1509, %v1525
    %s1528 = sadd.s32 %s79, 7
    %v1529 = vstv %s1528
    %vm1530 = vcmp.gt.s32.totalorder %v78, %v1529
    %v1531 = vsel %vm1530, 1, 0
    %1532 = vset.pattern.permute.xlu0 0
    %1533 = vperm.xlu0 %1532, %v1531
    %v1534 = vpop.permute.xlu0 %1533
    %vm1535 = vcmp.eq.s32.totalorder %v1534, 1
    %v1536 = vsel %vm1535, %v1527, %v1346
    %v1537 = vsel %vm1535, %v1521, %v1347
    %v1538 = vsel %vm1535, %v1527, 0.0
    %1540 = vrot.lane.b32.xlu0 %v1538, 32
    %v1541 = vpop.permute.xlu0 %1540
    %v1542 = vsel %vm88, %v1541, 0
    %1544 = vmatprep.subr.mxu0 0.0
    %1545 = vmatpush1.msra.mxu0 0.0
    %1546 = vmatprep.subr.mxu0 0.0
    %1547 = vmatpush1.msra.mxu0 0.0
    %1548 = vmatprep.subr.mxu0 0.0
    %1549 = vmatpush1.msra.mxu0 0.0
    %1550 = vmatprep.subr.mxu0 0.0
    %1551 = vmatpush1.msra.mxu0 0.0
    %1552 = vmatprep.subr.mxu0 0.0
    %1553 = vmatpush1.msra.mxu0 0.0
    %1554 = vmatprep.subr.mxu0 0.0
    %1555 = vmatpush1.msra.mxu0 0.0
    %1556 = vmatprep.subr.mxu0 0.0
    %1557 = vmatpush1.msra.mxu0 0.0
    %1558 = vmatprep.subr.mxu0 0.0
    %1559 = vmatpush1.msra.mxu0 0.0
    %1560 = vmatprep.subr.mxu0 0.0
    %1561 = vmatpush1.msra.mxu0 0.0
    %1562 = vmatprep.subr.mxu0 0.0
    %1563 = vmatpush1.msra.mxu0 0.0
    %1564 = vmatprep.subr.mxu0 0.0
    %1565 = vmatpush1.msra.mxu0 0.0
    %1566 = vmatprep.subr.mxu0 0.0
    %1567 = vmatpush1.msra.mxu0 0.0
    %1568 = vmatprep.subr.mxu0 0.0
    %1569 = vmatpush1.msra.mxu0 %v83
    %1570 = vmatprep.subr.mxu0 0.0
    %1571 = vmatpush1.msra.mxu0 %v82
    %1572 = vmatprep.subr.mxu0 0.0
    %1573 = vmatpush1.msra.mxu0 %v81
    %1574 = vmatprep.subr.mxu0 0.0
    %1575 = vmatpush1.msra.mxu0 %v80
    %1576 = vmatprep.subr.mxu0 0.0
    %1577 = vmatpush2.msra.mxu0 0.0
    %1578 = vmatprep.subr.mxu0 0.0
    %1579 = vmatpush2.msra.mxu0 0.0
    %1580 = vmatprep.subr.mxu0 0.0
    %1581 = vmatpush2.msra.mxu0 0.0
    %1582 = vmatprep.subr.mxu0 0.0
    %1583 = vmatpush2.msra.mxu0 0.0
    %1584 = vmatprep.subr.mxu0 0.0
    %1585 = vmatpush2.msra.mxu0 0.0
    %1586 = vmatprep.subr.mxu0 0.0
    %1587 = vmatpush2.msra.mxu0 0.0
    %1588 = vmatprep.subr.mxu0 0.0
    %1589 = vmatpush2.msra.mxu0 0.0
    %1590 = vmatprep.subr.mxu0 0.0
    %1591 = vmatpush2.msra.mxu0 0.0
    %1592 = vmatprep.subr.mxu0 0.0
    %1593 = vmatpush2.msra.mxu0 0.0
    %1594 = vmatprep.subr.mxu0 0.0
    %1595 = vmatpush2.msra.mxu0 0.0
    %1596 = vmatprep.subr.mxu0 0.0
    %1597 = vmatpush2.msra.mxu0 0.0
    %1598 = vmatprep.subr.mxu0 0.0
    %1599 = vmatpush2.msra.mxu0 0.0
    %1600 = vmatprep.subr.mxu0 0.0
    %1601 = vmatpush2.msra.mxu0 0.0
    %1602 = vmatprep.subr.mxu0 0.0
    %1603 = vmatpush2.msra.mxu0 0.0
    %1604 = vmatprep.subr.mxu0 0.0
    %1605 = vmatpush2.msra.mxu0 0.0
    %1606 = vmatprep.subr.mxu0 0.0
    %1607 = vmatpush2.msra.mxu0 0.0
    %1608 = vmatprep.mubr.f32.mxu0 0.0
    %1609 = vmatmul.mubr.f32.gmra.mxu0 %v1542
    %v1610 = vpop.f32.mrf.mxu0
    %v1611 = vadd.f32 %v208, %v1610
    %v1612 = vpop.f32.mrf.mxu0
    %1613 = vdwg.mxu0
    %s1614 = scalar_lea.vmem [#allocation10], 14
    %1615 = vst [vmem:[%s1614] sm:$0x3] %v1611
    %1617 = vrot.lane.b32.xlu0 %v1536, 32
    %v1618 = vpop.permute.xlu0 %1617
    %vm1620 = vcmask 254976
    %1621 = vst.msk [vmem:[#allocation2] sm:$0x3] %vm1620, %v1618
    %1623 = vrot.lane.b32.xlu0 %v1537, 96
    %v1624 = vpop.permute.xlu0 %1623
    %1626 = vst.msk [vmem:[#allocation3] sm:$0x3] %vm1620, %v1624
    // Predicated region
    $region42: #{tpu_custom_call.1} parent=1 // pred_check
      _
    $region43: #{tpu_custom_call.1} parent=1 // pred_check_branch
      %1628 = sbr.rel (0) target = $region45
    $region44: #{tpu_custom_call.1} parent=1 // pred_region
      %s1630 = ssub.s32 256, 256
      %1631 = vsyncadd [#allocation6], %s1630
      %s1632 = sshll.u32 [#allocation10], 4
      %s1633 = int_to_ptr.vmem [resolvable:$true] %s1632
      %1638 = dma.vmem_to_hbm [thread:$0]  %s1633, 256, %s6, [#allocation6], 32, 32, 2
    $region45: #{tpu_custom_call.1} parent=1 // pred_fallthru
      _
    // Predicated region
    $region46: #{tpu_custom_call.1} parent=1 // pred_check
      _
    $region47: #{tpu_custom_call.1} parent=1 // pred_check_branch
      %1640 = sbr.rel (0) target = $region49
    $region48: #{tpu_custom_call.1} parent=1 // pred_region
      %1641 = dma.done [#allocation6], 256
    $region49: #{tpu_custom_call.1} parent=1 // pred_fallthru
      _
    %1642 = vsyncpa [#allocation5], 1
    %1643 = vsyncpa [#allocation8], 1
    %1644 = vsyncpa [#allocation6], 1

</llo_original>
